<compile_context>
chip_gen: v7x
topology: tpu7x:2x2x1
jax: 0.10.0
libtpu: 0.0.40
codegen_flags: <defaults>
</compile_context>

<pallas_src>
import math
import functools

import jax
import jax.numpy as jnp
from jax.experimental import pallas as pl
from jax.experimental.pallas import tpu as pltpu


# ----------------------------- Pallas kernel -------------------------------

def seq2seq_kernel(xall_ref,   # ((S+1)*B, D) bf16  enc inputs (time-major) + dec step-0 input
                   wih_ref,    # (D, 3H)  bf16  GRU W_ih^T (tied enc/dec)
                   whh_ref,    # (H, 3H)  bf16  GRU W_hh^T
                   bi_ref,     # (1, 3H)  f32   folded input-side bias [bihr+bhhr; bihz+bhhz; bihn]
                   bhn3_ref,   # (1, 3H)  f32   full-width hidden-side bias [0; 0; b_hh_n]
                   wbig_ref,   # (H, 256) bf16  [fc_w^T @ W_ih^T | 0 | W_hh^T | 0] padded fused weight
                   bgi_ref,    # (1, 3H)  f32   fc_b @ W_ih^T + folded input bias
                   fcw_ref,    # (H, D)   bf16  fc1 weight^T
                   fcb_ref,    # (1, D)   f32   fc1 bias
                   out_ref,    # (B, T*D) f32   predictions, lane-dense batch-major
                   *, S, T, B, H, D):
    wih = wih_ref[...]
    whh = whh_ref[...]
    wbig = wbig_ref[...]
    fcw = fcw_ref[...]
    gh_off = wbig_ref.shape[1] // 2          # 128: gh half starts at a vreg boundary

    # Hoist bias broadcasts out of the unrolled step bodies
    # (JAX does not CSE broadcast_in_dim).
    bhn3_b = jnp.broadcast_to(bhn3_ref[...], (B, 3 * H))
    bgi_b = jnp.broadcast_to(bgi_ref[...], (B, 3 * H))
    fcb_b = jnp.broadcast_to(fcb_ref[...], (B, D))

    # One batched bf16 matmul (f32 accumulation) for every input-gate
    # projection: all S encoder steps plus decoder step 0 -> ((S+1)*B, 3H).
    gi_all = (jnp.dot(xall_ref[...], wih, preferred_element_type=jnp.float32)
              + jnp.broadcast_to(bi_ref[...], ((S + 1) * B, 3 * H)))

    def gru_gates(gi, gh, h):
        # gi carries (b_ih_r+b_hh_r, b_ih_z+b_hh_z, b_ih_n); gh carries (0, 0, b_hh_n)
        # added full-width at lane offset 0 before this call.  All math in f32.
        r = jax.nn.sigmoid(gi[:, 0 * H:1 * H] + gh[:, 0 * H:1 * H])
        z = jax.nn.sigmoid(gi[:, 1 * H:2 * H] + gh[:, 1 * H:2 * H])
        n = jnp.tanh(gi[:, 2 * H:3 * H] + r * gh[:, 2 * H:3 * H])
        return (1.0 - z) * n + z * h

    # ------------------ encoder: fully unrolled recurrence -------------------
    h = jnp.zeros((B, H), jnp.float32)
    hb = h.astype(jnp.bfloat16)
    for t in range(S):
        if t == 0:
            gh = bhn3_b                                   # h0 == 0 -> gh = [0,0,b_hh_n]
        else:
            gh = jnp.dot(hb, whh, preferred_element_type=jnp.float32) + bhn3_b
        h = gru_gates(gi_all[t * B:(t + 1) * B, :], gh, h)
        hb = h.astype(jnp.bfloat16)

    # -------- decoder: fully unrolled, feedback fused into one matmul --------
    preds = []
    for t in range(T):
        if t == 0:
            gi = gi_all[S * B:(S + 1) * B, :]             # decoder_inputs[:, 0] projection
            gh = jnp.dot(hb, whh, preferred_element_type=jnp.float32) + bhn3_b
        else:
            gg = jnp.dot(hb, wbig, preferred_element_type=jnp.float32)   # (B, 256)
            gi = gg[:, 0:3 * H] + bgi_b                   # == pred_{t-1} @ W_ih^T + bias_i
            gh = gg[:, gh_off:gh_off + 3 * H] + bhn3_b    # lane-offset-0 slice (padded layout)
        h = gru_gates(gi, gh, h)
        hb = h.astype(jnp.bfloat16)
        # fc1 projection is off the serial recurrence (feedback is fused into wbig).
        preds.append(jnp.dot(hb, fcw, preferred_element_type=jnp.float32) + fcb_b)

    # Single full-width, 128-aligned store instead of T masked D=64 stores.
    out_ref[...] = jnp.concatenate(preds, axis=1)


# ----------------------------- wrapper --------------------------------------

def prepare_derived(params):
    """Weight-derived tensors: compute once per weight update (constant under jit here)."""
    D = params["w_ih"].shape[1]
    H = params["w_hh"].shape[1]
    assert 3 * H <= 128, "padded-gh layout assumes 3H fits in one 128-lane group"

    wih = params["w_ih"].T                                   # (D, 3H)
    whh = params["w_hh"].T                                   # (H, 3H)
    fcw = params["fc_w"].T                                   # (H, D)
    fcb = params["fc_b"].reshape(1, D)                       # (1, D)
    bih = params["b_ih"]
    bhh = params["b_hh"]

    # Fold b_ih + b_hh for the r/z gates; b_hh_n stays on the hidden side
    # (it is scaled by r inside the n gate) and is carried full-width.
    bias_i = jnp.concatenate([bih[:2 * H] + bhh[:2 * H], bih[2 * H:]]).reshape(1, 3 * H)
    bhn3 = jnp.concatenate([jnp.zeros((2 * H,), jnp.float32), bhh[2 * H:]]).reshape(1, 3 * H)

    # Fuse the sampling-feedback path (f32):
    #   gi_{t+1} = pred_t @ wih + bias_i = h_t @ (fcw @ wih) + (fcb @ wih + bias_i)
    # and stack with whh, padding each half to a 128-lane group so both decoder
    # slices start at lane offset 0.
    w_big_gi = fcw @ wih                                     # (H, 3H)
    b_gi = fcb @ wih + bias_i                                # (1, 3H)
    pad = jnp.zeros((H, 128 - 3 * H), jnp.float32)
    w_big = jnp.concatenate([w_big_gi, pad, whh, pad], axis=1)   # (H, 256)

    return {
        "wih": wih.astype(jnp.bfloat16),
        "whh": whh.astype(jnp.bfloat16),
        "w_big": w_big.astype(jnp.bfloat16),
        "fcw": fcw.astype(jnp.bfloat16),
        "bias_i": bias_i, "bhn3": bhn3, "b_gi": b_gi, "fcb": fcb,
        "H": H, "D": D,
    }


def seq2seq_forward(encoder_inputs, decoder_inputs, target_seq_len, derived):
    """encoder_inputs: (B, S_enc, D), decoder_inputs: (B, T, D) -> (B, T, D)."""
    B, S, D = encoder_inputs.shape
    H = derived["H"]
    T = target_seq_len

    # All input-gate projection operands in one matrix: S encoder steps
    # (time-major) followed by decoder step 0.  bf16 for single-pass MXU.
    # TODO(synk): feed encoder inputs time-major from upstream to drop this
    # per-call transpose+concat dispatch in a live-weights setting.
    enc_tm = jnp.transpose(encoder_inputs, (1, 0, 2)).reshape(S * B, D)
    x_all = jnp.concatenate([enc_tm, decoder_inputs[:, 0, :]], axis=0).astype(jnp.bfloat16)

    kernel = functools.partial(seq2seq_kernel, S=S, T=T, B=B, H=H, D=D)
    vmem = pl.BlockSpec(memory_space=pltpu.MemorySpace.VMEM)

    # No grid / megacore split and no tiling: total VMEM footprint < 0.5 MiB
    # and the 16-step recurrence is serial, so extra parallel axes only add
    # overhead at these shapes.
    out_flat = pl.pallas_call(
        kernel,
        out_shape=jax.ShapeDtypeStruct((B, T * D), jnp.float32),
        in_specs=[vmem] * 9,
        out_specs=vmem,
    )(x_all, derived["wih"], derived["whh"], derived["bias_i"], derived["bhn3"],
      derived["w_big"], derived["b_gi"], derived["fcw"], derived["fcb"])

    return out_flat.reshape(B, T, D)                         # free reshape, no transpose


# ----------------------------- reference (plain JAX, f32 HIGHEST) ------------

def seq2seq_reference(encoder_inputs, decoder_inputs, target_seq_len, params):
    H = params["w_hh"].shape[1]
    hi = jax.lax.Precision.HIGHEST
    dot = functools.partial(jnp.dot, precision=hi)
    wih, whh = params["w_ih"].T, params["w_hh"].T
    bih, bhh = params["b_ih"], params["b_hh"]
    fcw, fcb = params["fc_w"].T, params["fc_b"]

    def gru_step(x, h):
        gi = dot(x, wih) + bih
        gh = dot(h, whh) + bhh
        r = jax.nn.sigmoid(gi[:, :H] + gh[:, :H])
        z = jax.nn.sigmoid(gi[:, H:2 * H] + gh[:, H:2 * H])
        n = jnp.tanh(gi[:, 2 * H:] + r * gh[:, 2 * H:])
        return (1.0 - z) * n + z * h

    B = encoder_inputs.shape[0]
    h = jnp.zeros((B, H), jnp.float32)
    for t in range(encoder_inputs.shape[1]):
        h = gru_step(encoder_inputs[:, t, :], h)

    x = decoder_inputs[:, 0, :]
    preds = []
    for _ in range(target_seq_len):
        h = gru_step(x, h)
        pred = dot(h, fcw) + fcb
        preds.append(pred)
        x = pred
    return jnp.stack(preds, axis=1)


# ----------------------------- params ---------------------------------------

def init_params(key, input_size, rnn_size):
    ks = jax.random.split(key, 6)
    kg = 1.0 / math.sqrt(rnn_size)

    def u(k, shape, bound):
        return jax.random.uniform(k, shape, jnp.float32, -bound, bound)

    return {
        # tied GRU (enc_GRU is dec_GRU), PyTorch layout (3H, in) / (3H, H)
        "w_ih": u(ks[0], (3 * rnn_size, input_size), kg),
        "w_hh": u(ks[1], (3 * rnn_size, rnn_size), kg),
        "b_ih": u(ks[2], (3 * rnn_size,), kg),
        "b_hh": u(ks[3], (3 * rnn_size,), kg),
        # fc1: Linear(rnn_size -> input_size)
        "fc_w": u(ks[4], (input_size, rnn_size), kg),
        "fc_b": u(ks[5], (input_size,), kg),
    }


# ----------------------------- main ------------------------------------------

if __name__ == "__main__":
    # Small shapes consistent with the module:
    # MOTION_SIZE=54 + number_of_actions=10 (one_hot) -> input_size=64
    number_of_actions = 10
    input_size = 54 + number_of_actions          # D = 64
    rnn_size = 32                                # H
    batch_size = 8                               # B
    source_seq_len = 8                           # forward uses full enc seq
    target_seq_len = 8                           # T

    key = jax.random.PRNGKey(0)
    kp, ke, kd = jax.random.split(key, 3)

    params = init_params(kp, input_size, rnn_size)
    encoder_inputs = jax.random.normal(
        ke, (batch_size, source_seq_len, input_size), jnp.float32)
    decoder_inputs = jax.random.normal(
        kd, (batch_size, target_seq_len, input_size), jnp.float32)

    derived = prepare_derived(params)            # once per weight update

    fwd = jax.jit(functools.partial(seq2seq_forward,
                                    target_seq_len=target_seq_len,
                                    derived=derived))
    out = fwd(encoder_inputs, decoder_inputs)
    out = jax.block_until_ready(out)

    ref = seq2seq_reference(encoder_inputs, decoder_inputs,
                            target_seq_len, params)
    assert out.shape == (batch_size, target_seq_len, input_size)
    # Tolerance documented per review: the kernel feeds the MXU bf16 inputs
    # with f32 accumulation across a 16-step fed-back recurrence; deviation
    # from the f32 HIGHEST-precision reference is ~1e-3 at these shapes, so we
    # assert with headroom at 2e-2.
    assert jnp.allclose(out, ref, rtol=2e-2, atol=2e-2), \
        float(jnp.max(jnp.abs(out - ref)))

    print("KERNEL_OK")
</pallas_src>

<mosaic_0001>
module attributes {stable_mosaic.version = 11 : i64} {
  func.func @seq2seq_kernel(%arg0: memref<72x64xbf16, #tpu.memory_space<vmem>>, %arg1: memref<64x96xbf16, #tpu.memory_space<vmem>>, %arg2: memref<32x96xbf16, #tpu.memory_space<vmem>>, %arg3: memref<1x96xf32, #tpu.memory_space<vmem>>, %arg4: memref<1x96xf32, #tpu.memory_space<vmem>>, %arg5: memref<32x256xbf16, #tpu.memory_space<vmem>>, %arg6: memref<1x96xf32, #tpu.memory_space<vmem>>, %arg7: memref<32x64xbf16, #tpu.memory_space<vmem>>, %arg8: memref<1x64xf32, #tpu.memory_space<vmem>>, %arg9: memref<8x512xf32, #tpu.memory_space<vmem>>) attributes {dimension_semantics = [], scalar_prefetch = 0 : i64, scratch_operands = 0 : i64, tpu.core_type = #tpu.core_type<tc>} {
    %c0 = arith.constant 0 : index
    %c0_0 = arith.constant 0 : index
    %0 = vector.load %arg1[%c0, %c0_0] : memref<64x96xbf16, #tpu.memory_space<vmem>>, vector<64x96xbf16>
    %c0_1 = arith.constant 0 : index
    %c0_2 = arith.constant 0 : index
    %1 = vector.load %arg2[%c0_1, %c0_2] : memref<32x96xbf16, #tpu.memory_space<vmem>>, vector<32x96xbf16>
    %c0_3 = arith.constant 0 : index
    %c0_4 = arith.constant 0 : index
    %2 = vector.load %arg5[%c0_3, %c0_4] : memref<32x256xbf16, #tpu.memory_space<vmem>>, vector<32x256xbf16>
    %c0_5 = arith.constant 0 : index
    %c0_6 = arith.constant 0 : index
    %3 = vector.load %arg7[%c0_5, %c0_6] : memref<32x64xbf16, #tpu.memory_space<vmem>>, vector<32x64xbf16>
    %c0_7 = arith.constant 0 : index
    %c0_8 = arith.constant 0 : index
    %4 = vector.load %arg4[%c0_7, %c0_8] : memref<1x96xf32, #tpu.memory_space<vmem>>, vector<1x96xf32>
    %5 = vector.shape_cast %4 : vector<1x96xf32> to vector<1x96xf32>
    %6 = vector.broadcast %5 : vector<1x96xf32> to vector<8x96xf32>
    %c0_9 = arith.constant 0 : index
    %c0_10 = arith.constant 0 : index
    %7 = vector.load %arg6[%c0_9, %c0_10] : memref<1x96xf32, #tpu.memory_space<vmem>>, vector<1x96xf32>
    %8 = vector.shape_cast %7 : vector<1x96xf32> to vector<1x96xf32>
    %9 = vector.broadcast %8 : vector<1x96xf32> to vector<8x96xf32>
    %c0_11 = arith.constant 0 : index
    %c0_12 = arith.constant 0 : index
    %10 = vector.load %arg8[%c0_11, %c0_12] : memref<1x64xf32, #tpu.memory_space<vmem>>, vector<1x64xf32>
    %11 = vector.shape_cast %10 : vector<1x64xf32> to vector<1x64xf32>
    %12 = vector.broadcast %11 : vector<1x64xf32> to vector<8x64xf32>
    %c0_13 = arith.constant 0 : index
    %c0_14 = arith.constant 0 : index
    %13 = vector.load %arg0[%c0_13, %c0_14] : memref<72x64xbf16, #tpu.memory_space<vmem>>, vector<72x64xbf16>
    %cst = arith.constant dense<0.000000e+00> : vector<72x96xf32>
    %14 = tpu.matmul %13, %0, %cst {dimension_numbers = #tpu.dot_dimension_numbers<[1], [0], [0], [1], [0, 0, 1, 1], [], []>} : vector<72x64xbf16>, vector<64x96xbf16>, vector<72x96xf32> -> vector<72x96xf32>
    %c0_15 = arith.constant 0 : index
    %c0_16 = arith.constant 0 : index
    %15 = vector.load %arg3[%c0_15, %c0_16] : memref<1x96xf32, #tpu.memory_space<vmem>>, vector<1x96xf32>
    %16 = vector.shape_cast %15 : vector<1x96xf32> to vector<1x96xf32>
    %17 = vector.broadcast %16 : vector<1x96xf32> to vector<72x96xf32>
    %18 = arith.addf %14, %17 : vector<72x96xf32>
    %cst_17 = arith.constant 0.000000e+00 : f32
    %19 = vector.broadcast %cst_17 : f32 to vector<8x32xf32>
    %20 = vector.extract_strided_slice %18 {offsets = [0, 0], sizes = [8, 96], strides = [1, 1]} : vector<72x96xf32> to vector<8x96xf32>
    %21 = vector.extract_strided_slice %20 {offsets = [0, 0], sizes = [8, 32], strides = [1, 1]} : vector<8x96xf32> to vector<8x32xf32>
    %22 = vector.extract_strided_slice %6 {offsets = [0, 0], sizes = [8, 32], strides = [1, 1]} : vector<8x96xf32> to vector<8x32xf32>
    %23 = arith.addf %21, %22 : vector<8x32xf32>
    %24 = arith.negf %23 : vector<8x32xf32>
    %25 = math.exp %24 : vector<8x32xf32>
    %cst_18 = arith.constant 1.000000e+00 : f32
    %26 = vector.broadcast %cst_18 : f32 to vector<8x32xf32>
    %27 = arith.addf %26, %25 : vector<8x32xf32>
    %28 = arith.divf %26, %27 : vector<8x32xf32>
    %29 = vector.extract_strided_slice %20 {offsets = [0, 32], sizes = [8, 32], strides = [1, 1]} : vector<8x96xf32> to vector<8x32xf32>
    %30 = vector.extract_strided_slice %6 {offsets = [0, 32], sizes = [8, 32], strides = [1, 1]} : vector<8x96xf32> to vector<8x32xf32>
    %31 = arith.addf %29, %30 : vector<8x32xf32>
    %32 = arith.negf %31 : vector<8x32xf32>
    %33 = math.exp %32 : vector<8x32xf32>
    %cst_19 = arith.constant 1.000000e+00 : f32
    %34 = vector.broadcast %cst_19 : f32 to vector<8x32xf32>
    %35 = arith.addf %34, %33 : vector<8x32xf32>
    %36 = arith.divf %34, %35 : vector<8x32xf32>
    %37 = vector.extract_strided_slice %20 {offsets = [0, 64], sizes = [8, 32], strides = [1, 1]} : vector<8x96xf32> to vector<8x32xf32>
    %38 = vector.extract_strided_slice %6 {offsets = [0, 64], sizes = [8, 32], strides = [1, 1]} : vector<8x96xf32> to vector<8x32xf32>
    %39 = arith.mulf %28, %38 : vector<8x32xf32>
    %40 = arith.addf %37, %39 : vector<8x32xf32>
    %41 = math.tanh %40 : vector<8x32xf32>
    %cst_20 = arith.constant 1.000000e+00 : f32
    %42 = vector.broadcast %cst_20 : f32 to vector<8x32xf32>
    %43 = arith.subf %42, %36 : vector<8x32xf32>
    %44 = arith.mulf %43, %41 : vector<8x32xf32>
    %45 = arith.mulf %36, %19 : vector<8x32xf32>
    %46 = arith.addf %44, %45 : vector<8x32xf32>
    %47 = arith.truncf %46 : vector<8x32xf32> to vector<8x32xbf16>
    %cst_21 = arith.constant dense<0.000000e+00> : vector<8x96xf32>
    %48 = tpu.matmul %47, %1, %cst_21 {dimension_numbers = #tpu.dot_dimension_numbers<[1], [0], [0], [1], [0, 0, 1, 1], [], []>} : vector<8x32xbf16>, vector<32x96xbf16>, vector<8x96xf32> -> vector<8x96xf32>
    %49 = arith.addf %48, %6 : vector<8x96xf32>
    %50 = vector.extract_strided_slice %18 {offsets = [8, 0], sizes = [8, 96], strides = [1, 1]} : vector<72x96xf32> to vector<8x96xf32>
    %51 = vector.extract_strided_slice %50 {offsets = [0, 0], sizes = [8, 32], strides = [1, 1]} : vector<8x96xf32> to vector<8x32xf32>
    %52 = vector.extract_strided_slice %49 {offsets = [0, 0], sizes = [8, 32], strides = [1, 1]} : vector<8x96xf32> to vector<8x32xf32>
    %53 = arith.addf %51, %52 : vector<8x32xf32>
    %54 = arith.negf %53 : vector<8x32xf32>
    %55 = math.exp %54 : vector<8x32xf32>
    %cst_22 = arith.constant 1.000000e+00 : f32
    %56 = vector.broadcast %cst_22 : f32 to vector<8x32xf32>
    %57 = arith.addf %56, %55 : vector<8x32xf32>
    %58 = arith.divf %56, %57 : vector<8x32xf32>
    %59 = vector.extract_strided_slice %50 {offsets = [0, 32], sizes = [8, 32], strides = [1, 1]} : vector<8x96xf32> to vector<8x32xf32>
    %60 = vector.extract_strided_slice %49 {offsets = [0, 32], sizes = [8, 32], strides = [1, 1]} : vector<8x96xf32> to vector<8x32xf32>
    %61 = arith.addf %59, %60 : vector<8x32xf32>
    %62 = arith.negf %61 : vector<8x32xf32>
    %63 = math.exp %62 : vector<8x32xf32>
    %cst_23 = arith.constant 1.000000e+00 : f32
    %64 = vector.broadcast %cst_23 : f32 to vector<8x32xf32>
    %65 = arith.addf %64, %63 : vector<8x32xf32>
    %66 = arith.divf %64, %65 : vector<8x32xf32>
    %67 = vector.extract_strided_slice %50 {offsets = [0, 64], sizes = [8, 32], strides = [1, 1]} : vector<8x96xf32> to vector<8x32xf32>
    %68 = vector.extract_strided_slice %49 {offsets = [0, 64], sizes = [8, 32], strides = [1, 1]} : vector<8x96xf32> to vector<8x32xf32>
    %69 = arith.mulf %58, %68 : vector<8x32xf32>
    %70 = arith.addf %67, %69 : vector<8x32xf32>
    %71 = math.tanh %70 : vector<8x32xf32>
    %cst_24 = arith.constant 1.000000e+00 : f32
    %72 = vector.broadcast %cst_24 : f32 to vector<8x32xf32>
    %73 = arith.subf %72, %66 : vector<8x32xf32>
    %74 = arith.mulf %73, %71 : vector<8x32xf32>
    %75 = arith.mulf %66, %46 : vector<8x32xf32>
    %76 = arith.addf %74, %75 : vector<8x32xf32>
    %77 = arith.truncf %76 : vector<8x32xf32> to vector<8x32xbf16>
    %cst_25 = arith.constant dense<0.000000e+00> : vector<8x96xf32>
    %78 = tpu.matmul %77, %1, %cst_25 {dimension_numbers = #tpu.dot_dimension_numbers<[1], [0], [0], [1], [0, 0, 1, 1], [], []>} : vector<8x32xbf16>, vector<32x96xbf16>, vector<8x96xf32> -> vector<8x96xf32>
    %79 = arith.addf %78, %6 : vector<8x96xf32>
    %80 = vector.extract_strided_slice %18 {offsets = [16, 0], sizes = [8, 96], strides = [1, 1]} : vector<72x96xf32> to vector<8x96xf32>
    %81 = vector.extract_strided_slice %80 {offsets = [0, 0], sizes = [8, 32], strides = [1, 1]} : vector<8x96xf32> to vector<8x32xf32>
    %82 = vector.extract_strided_slice %79 {offsets = [0, 0], sizes = [8, 32], strides = [1, 1]} : vector<8x96xf32> to vector<8x32xf32>
    %83 = arith.addf %81, %82 : vector<8x32xf32>
    %84 = arith.negf %83 : vector<8x32xf32>
    %85 = math.exp %84 : vector<8x32xf32>
    %cst_26 = arith.constant 1.000000e+00 : f32
    %86 = vector.broadcast %cst_26 : f32 to vector<8x32xf32>
    %87 = arith.addf %86, %85 : vector<8x32xf32>
    %88 = arith.divf %86, %87 : vector<8x32xf32>
    %89 = vector.extract_strided_slice %80 {offsets = [0, 32], sizes = [8, 32], strides = [1, 1]} : vector<8x96xf32> to vector<8x32xf32>
    %90 = vector.extract_strided_slice %79 {offsets = [0, 32], sizes = [8, 32], strides = [1, 1]} : vector<8x96xf32> to vector<8x32xf32>
    %91 = arith.addf %89, %90 : vector<8x32xf32>
    %92 = arith.negf %91 : vector<8x32xf32>
    %93 = math.exp %92 : vector<8x32xf32>
    %cst_27 = arith.constant 1.000000e+00 : f32
    %94 = vector.broadcast %cst_27 : f32 to vector<8x32xf32>
    %95 = arith.addf %94, %93 : vector<8x32xf32>
    %96 = arith.divf %94, %95 : vector<8x32xf32>
    %97 = vector.extract_strided_slice %80 {offsets = [0, 64], sizes = [8, 32], strides = [1, 1]} : vector<8x96xf32> to vector<8x32xf32>
    %98 = vector.extract_strided_slice %79 {offsets = [0, 64], sizes = [8, 32], strides = [1, 1]} : vector<8x96xf32> to vector<8x32xf32>
    %99 = arith.mulf %88, %98 : vector<8x32xf32>
    %100 = arith.addf %97, %99 : vector<8x32xf32>
    %101 = math.tanh %100 : vector<8x32xf32>
    %cst_28 = arith.constant 1.000000e+00 : f32
    %102 = vector.broadcast %cst_28 : f32 to vector<8x32xf32>
    %103 = arith.subf %102, %96 : vector<8x32xf32>
    %104 = arith.mulf %103, %101 : vector<8x32xf32>
    %105 = arith.mulf %96, %76 : vector<8x32xf32>
    %106 = arith.addf %104, %105 : vector<8x32xf32>
    %107 = arith.truncf %106 : vector<8x32xf32> to vector<8x32xbf16>
    %cst_29 = arith.constant dense<0.000000e+00> : vector<8x96xf32>
    %108 = tpu.matmul %107, %1, %cst_29 {dimension_numbers = #tpu.dot_dimension_numbers<[1], [0], [0], [1], [0, 0, 1, 1], [], []>} : vector<8x32xbf16>, vector<32x96xbf16>, vector<8x96xf32> -> vector<8x96xf32>
    %109 = arith.addf %108, %6 : vector<8x96xf32>
    %110 = vector.extract_strided_slice %18 {offsets = [24, 0], sizes = [8, 96], strides = [1, 1]} : vector<72x96xf32> to vector<8x96xf32>
    %111 = vector.extract_strided_slice %110 {offsets = [0, 0], sizes = [8, 32], strides = [1, 1]} : vector<8x96xf32> to vector<8x32xf32>
    %112 = vector.extract_strided_slice %109 {offsets = [0, 0], sizes = [8, 32], strides = [1, 1]} : vector<8x96xf32> to vector<8x32xf32>
    %113 = arith.addf %111, %112 : vector<8x32xf32>
    %114 = arith.negf %113 : vector<8x32xf32>
    %115 = math.exp %114 : vector<8x32xf32>
    %cst_30 = arith.constant 1.000000e+00 : f32
    %116 = vector.broadcast %cst_30 : f32 to vector<8x32xf32>
    %117 = arith.addf %116, %115 : vector<8x32xf32>
    %118 = arith.divf %116, %117 : vector<8x32xf32>
    %119 = vector.extract_strided_slice %110 {offsets = [0, 32], sizes = [8, 32], strides = [1, 1]} : vector<8x96xf32> to vector<8x32xf32>
    %120 = vector.extract_strided_slice %109 {offsets = [0, 32], sizes = [8, 32], strides = [1, 1]} : vector<8x96xf32> to vector<8x32xf32>
    %121 = arith.addf %119, %120 : vector<8x32xf32>
    %122 = arith.negf %121 : vector<8x32xf32>
    %123 = math.exp %122 : vector<8x32xf32>
    %cst_31 = arith.constant 1.000000e+00 : f32
    %124 = vector.broadcast %cst_31 : f32 to vector<8x32xf32>
    %125 = arith.addf %124, %123 : vector<8x32xf32>
    %126 = arith.divf %124, %125 : vector<8x32xf32>
    %127 = vector.extract_strided_slice %110 {offsets = [0, 64], sizes = [8, 32], strides = [1, 1]} : vector<8x96xf32> to vector<8x32xf32>
    %128 = vector.extract_strided_slice %109 {offsets = [0, 64], sizes = [8, 32], strides = [1, 1]} : vector<8x96xf32> to vector<8x32xf32>
    %129 = arith.mulf %118, %128 : vector<8x32xf32>
    %130 = arith.addf %127, %129 : vector<8x32xf32>
    %131 = math.tanh %130 : vector<8x32xf32>
    %cst_32 = arith.constant 1.000000e+00 : f32
    %132 = vector.broadcast %cst_32 : f32 to vector<8x32xf32>
    %133 = arith.subf %132, %126 : vector<8x32xf32>
    %134 = arith.mulf %133, %131 : vector<8x32xf32>
    %135 = arith.mulf %126, %106 : vector<8x32xf32>
    %136 = arith.addf %134, %135 : vector<8x32xf32>
    %137 = arith.truncf %136 : vector<8x32xf32> to vector<8x32xbf16>
    %cst_33 = arith.constant dense<0.000000e+00> : vector<8x96xf32>
    %138 = tpu.matmul %137, %1, %cst_33 {dimension_numbers = #tpu.dot_dimension_numbers<[1], [0], [0], [1], [0, 0, 1, 1], [], []>} : vector<8x32xbf16>, vector<32x96xbf16>, vector<8x96xf32> -> vector<8x96xf32>
    %139 = arith.addf %138, %6 : vector<8x96xf32>
    %140 = vector.extract_strided_slice %18 {offsets = [32, 0], sizes = [8, 96], strides = [1, 1]} : vector<72x96xf32> to vector<8x96xf32>
    %141 = vector.extract_strided_slice %140 {offsets = [0, 0], sizes = [8, 32], strides = [1, 1]} : vector<8x96xf32> to vector<8x32xf32>
    %142 = vector.extract_strided_slice %139 {offsets = [0, 0], sizes = [8, 32], strides = [1, 1]} : vector<8x96xf32> to vector<8x32xf32>
    %143 = arith.addf %141, %142 : vector<8x32xf32>
    %144 = arith.negf %143 : vector<8x32xf32>
    %145 = math.exp %144 : vector<8x32xf32>
    %cst_34 = arith.constant 1.000000e+00 : f32
    %146 = vector.broadcast %cst_34 : f32 to vector<8x32xf32>
    %147 = arith.addf %146, %145 : vector<8x32xf32>
    %148 = arith.divf %146, %147 : vector<8x32xf32>
    %149 = vector.extract_strided_slice %140 {offsets = [0, 32], sizes = [8, 32], strides = [1, 1]} : vector<8x96xf32> to vector<8x32xf32>
    %150 = vector.extract_strided_slice %139 {offsets = [0, 32], sizes = [8, 32], strides = [1, 1]} : vector<8x96xf32> to vector<8x32xf32>
    %151 = arith.addf %149, %150 : vector<8x32xf32>
    %152 = arith.negf %151 : vector<8x32xf32>
    %153 = math.exp %152 : vector<8x32xf32>
    %cst_35 = arith.constant 1.000000e+00 : f32
    %154 = vector.broadcast %cst_35 : f32 to vector<8x32xf32>
    %155 = arith.addf %154, %153 : vector<8x32xf32>
    %156 = arith.divf %154, %155 : vector<8x32xf32>
    %157 = vector.extract_strided_slice %140 {offsets = [0, 64], sizes = [8, 32], strides = [1, 1]} : vector<8x96xf32> to vector<8x32xf32>
    %158 = vector.extract_strided_slice %139 {offsets = [0, 64], sizes = [8, 32], strides = [1, 1]} : vector<8x96xf32> to vector<8x32xf32>
    %159 = arith.mulf %148, %158 : vector<8x32xf32>
    %160 = arith.addf %157, %159 : vector<8x32xf32>
    %161 = math.tanh %160 : vector<8x32xf32>
    %cst_36 = arith.constant 1.000000e+00 : f32
    %162 = vector.broadcast %cst_36 : f32 to vector<8x32xf32>
    %163 = arith.subf %162, %156 : vector<8x32xf32>
    %164 = arith.mulf %163, %161 : vector<8x32xf32>
    %165 = arith.mulf %156, %136 : vector<8x32xf32>
    %166 = arith.addf %164, %165 : vector<8x32xf32>
    %167 = arith.truncf %166 : vector<8x32xf32> to vector<8x32xbf16>
    %cst_37 = arith.constant dense<0.000000e+00> : vector<8x96xf32>
    %168 = tpu.matmul %167, %1, %cst_37 {dimension_numbers = #tpu.dot_dimension_numbers<[1], [0], [0], [1], [0, 0, 1, 1], [], []>} : vector<8x32xbf16>, vector<32x96xbf16>, vector<8x96xf32> -> vector<8x96xf32>
    %169 = arith.addf %168, %6 : vector<8x96xf32>
    %170 = vector.extract_strided_slice %18 {offsets = [40, 0], sizes = [8, 96], strides = [1, 1]} : vector<72x96xf32> to vector<8x96xf32>
    %171 = vector.extract_strided_slice %170 {offsets = [0, 0], sizes = [8, 32], strides = [1, 1]} : vector<8x96xf32> to vector<8x32xf32>
    %172 = vector.extract_strided_slice %169 {offsets = [0, 0], sizes = [8, 32], strides = [1, 1]} : vector<8x96xf32> to vector<8x32xf32>
    %173 = arith.addf %171, %172 : vector<8x32xf32>
    %174 = arith.negf %173 : vector<8x32xf32>
    %175 = math.exp %174 : vector<8x32xf32>
    %cst_38 = arith.constant 1.000000e+00 : f32
    %176 = vector.broadcast %cst_38 : f32 to vector<8x32xf32>
    %177 = arith.addf %176, %175 : vector<8x32xf32>
    %178 = arith.divf %176, %177 : vector<8x32xf32>
    %179 = vector.extract_strided_slice %170 {offsets = [0, 32], sizes = [8, 32], strides = [1, 1]} : vector<8x96xf32> to vector<8x32xf32>
    %180 = vector.extract_strided_slice %169 {offsets = [0, 32], sizes = [8, 32], strides = [1, 1]} : vector<8x96xf32> to vector<8x32xf32>
    %181 = arith.addf %179, %180 : vector<8x32xf32>
    %182 = arith.negf %181 : vector<8x32xf32>
    %183 = math.exp %182 : vector<8x32xf32>
    %cst_39 = arith.constant 1.000000e+00 : f32
    %184 = vector.broadcast %cst_39 : f32 to vector<8x32xf32>
    %185 = arith.addf %184, %183 : vector<8x32xf32>
    %186 = arith.divf %184, %185 : vector<8x32xf32>
    %187 = vector.extract_strided_slice %170 {offsets = [0, 64], sizes = [8, 32], strides = [1, 1]} : vector<8x96xf32> to vector<8x32xf32>
    %188 = vector.extract_strided_slice %169 {offsets = [0, 64], sizes = [8, 32], strides = [1, 1]} : vector<8x96xf32> to vector<8x32xf32>
    %189 = arith.mulf %178, %188 : vector<8x32xf32>
    %190 = arith.addf %187, %189 : vector<8x32xf32>
    %191 = math.tanh %190 : vector<8x32xf32>
    %cst_40 = arith.constant 1.000000e+00 : f32
    %192 = vector.broadcast %cst_40 : f32 to vector<8x32xf32>
    %193 = arith.subf %192, %186 : vector<8x32xf32>
    %194 = arith.mulf %193, %191 : vector<8x32xf32>
    %195 = arith.mulf %186, %166 : vector<8x32xf32>
    %196 = arith.addf %194, %195 : vector<8x32xf32>
    %197 = arith.truncf %196 : vector<8x32xf32> to vector<8x32xbf16>
    %cst_41 = arith.constant dense<0.000000e+00> : vector<8x96xf32>
    %198 = tpu.matmul %197, %1, %cst_41 {dimension_numbers = #tpu.dot_dimension_numbers<[1], [0], [0], [1], [0, 0, 1, 1], [], []>} : vector<8x32xbf16>, vector<32x96xbf16>, vector<8x96xf32> -> vector<8x96xf32>
    %199 = arith.addf %198, %6 : vector<8x96xf32>
    %200 = vector.extract_strided_slice %18 {offsets = [48, 0], sizes = [8, 96], strides = [1, 1]} : vector<72x96xf32> to vector<8x96xf32>
    %201 = vector.extract_strided_slice %200 {offsets = [0, 0], sizes = [8, 32], strides = [1, 1]} : vector<8x96xf32> to vector<8x32xf32>
    %202 = vector.extract_strided_slice %199 {offsets = [0, 0], sizes = [8, 32], strides = [1, 1]} : vector<8x96xf32> to vector<8x32xf32>
    %203 = arith.addf %201, %202 : vector<8x32xf32>
    %204 = arith.negf %203 : vector<8x32xf32>
    %205 = math.exp %204 : vector<8x32xf32>
    %cst_42 = arith.constant 1.000000e+00 : f32
    %206 = vector.broadcast %cst_42 : f32 to vector<8x32xf32>
    %207 = arith.addf %206, %205 : vector<8x32xf32>
    %208 = arith.divf %206, %207 : vector<8x32xf32>
    %209 = vector.extract_strided_slice %200 {offsets = [0, 32], sizes = [8, 32], strides = [1, 1]} : vector<8x96xf32> to vector<8x32xf32>
    %210 = vector.extract_strided_slice %199 {offsets = [0, 32], sizes = [8, 32], strides = [1, 1]} : vector<8x96xf32> to vector<8x32xf32>
    %211 = arith.addf %209, %210 : vector<8x32xf32>
    %212 = arith.negf %211 : vector<8x32xf32>
    %213 = math.exp %212 : vector<8x32xf32>
    %cst_43 = arith.constant 1.000000e+00 : f32
    %214 = vector.broadcast %cst_43 : f32 to vector<8x32xf32>
    %215 = arith.addf %214, %213 : vector<8x32xf32>
    %216 = arith.divf %214, %215 : vector<8x32xf32>
    %217 = vector.extract_strided_slice %200 {offsets = [0, 64], sizes = [8, 32], strides = [1, 1]} : vector<8x96xf32> to vector<8x32xf32>
    %218 = vector.extract_strided_slice %199 {offsets = [0, 64], sizes = [8, 32], strides = [1, 1]} : vector<8x96xf32> to vector<8x32xf32>
    %219 = arith.mulf %208, %218 : vector<8x32xf32>
    %220 = arith.addf %217, %219 : vector<8x32xf32>
    %221 = math.tanh %220 : vector<8x32xf32>
    %cst_44 = arith.constant 1.000000e+00 : f32
    %222 = vector.broadcast %cst_44 : f32 to vector<8x32xf32>
    %223 = arith.subf %222, %216 : vector<8x32xf32>
    %224 = arith.mulf %223, %221 : vector<8x32xf32>
    %225 = arith.mulf %216, %196 : vector<8x32xf32>
    %226 = arith.addf %224, %225 : vector<8x32xf32>
    %227 = arith.truncf %226 : vector<8x32xf32> to vector<8x32xbf16>
    %cst_45 = arith.constant dense<0.000000e+00> : vector<8x96xf32>
    %228 = tpu.matmul %227, %1, %cst_45 {dimension_numbers = #tpu.dot_dimension_numbers<[1], [0], [0], [1], [0, 0, 1, 1], [], []>} : vector<8x32xbf16>, vector<32x96xbf16>, vector<8x96xf32> -> vector<8x96xf32>
    %229 = arith.addf %228, %6 : vector<8x96xf32>
    %230 = vector.extract_strided_slice %18 {offsets = [56, 0], sizes = [8, 96], strides = [1, 1]} : vector<72x96xf32> to vector<8x96xf32>
    %231 = vector.extract_strided_slice %230 {offsets = [0, 0], sizes = [8, 32], strides = [1, 1]} : vector<8x96xf32> to vector<8x32xf32>
    %232 = vector.extract_strided_slice %229 {offsets = [0, 0], sizes = [8, 32], strides = [1, 1]} : vector<8x96xf32> to vector<8x32xf32>
    %233 = arith.addf %231, %232 : vector<8x32xf32>
    %234 = arith.negf %233 : vector<8x32xf32>
    %235 = math.exp %234 : vector<8x32xf32>
    %cst_46 = arith.constant 1.000000e+00 : f32
    %236 = vector.broadcast %cst_46 : f32 to vector<8x32xf32>
    %237 = arith.addf %236, %235 : vector<8x32xf32>
    %238 = arith.divf %236, %237 : vector<8x32xf32>
    %239 = vector.extract_strided_slice %230 {offsets = [0, 32], sizes = [8, 32], strides = [1, 1]} : vector<8x96xf32> to vector<8x32xf32>
    %240 = vector.extract_strided_slice %229 {offsets = [0, 32], sizes = [8, 32], strides = [1, 1]} : vector<8x96xf32> to vector<8x32xf32>
    %241 = arith.addf %239, %240 : vector<8x32xf32>
    %242 = arith.negf %241 : vector<8x32xf32>
    %243 = math.exp %242 : vector<8x32xf32>
    %cst_47 = arith.constant 1.000000e+00 : f32
    %244 = vector.broadcast %cst_47 : f32 to vector<8x32xf32>
    %245 = arith.addf %244, %243 : vector<8x32xf32>
    %246 = arith.divf %244, %245 : vector<8x32xf32>
    %247 = vector.extract_strided_slice %230 {offsets = [0, 64], sizes = [8, 32], strides = [1, 1]} : vector<8x96xf32> to vector<8x32xf32>
    %248 = vector.extract_strided_slice %229 {offsets = [0, 64], sizes = [8, 32], strides = [1, 1]} : vector<8x96xf32> to vector<8x32xf32>
    %249 = arith.mulf %238, %248 : vector<8x32xf32>
    %250 = arith.addf %247, %249 : vector<8x32xf32>
    %251 = math.tanh %250 : vector<8x32xf32>
    %cst_48 = arith.constant 1.000000e+00 : f32
    %252 = vector.broadcast %cst_48 : f32 to vector<8x32xf32>
    %253 = arith.subf %252, %246 : vector<8x32xf32>
    %254 = arith.mulf %253, %251 : vector<8x32xf32>
    %255 = arith.mulf %246, %226 : vector<8x32xf32>
    %256 = arith.addf %254, %255 : vector<8x32xf32>
    %257 = arith.truncf %256 : vector<8x32xf32> to vector<8x32xbf16>
    %258 = vector.extract_strided_slice %18 {offsets = [64, 0], sizes = [8, 96], strides = [1, 1]} : vector<72x96xf32> to vector<8x96xf32>
    %cst_49 = arith.constant dense<0.000000e+00> : vector<8x96xf32>
    %259 = tpu.matmul %257, %1, %cst_49 {dimension_numbers = #tpu.dot_dimension_numbers<[1], [0], [0], [1], [0, 0, 1, 1], [], []>} : vector<8x32xbf16>, vector<32x96xbf16>, vector<8x96xf32> -> vector<8x96xf32>
    %260 = arith.addf %259, %6 : vector<8x96xf32>
    %261 = vector.extract_strided_slice %258 {offsets = [0, 0], sizes = [8, 32], strides = [1, 1]} : vector<8x96xf32> to vector<8x32xf32>
    %262 = vector.extract_strided_slice %260 {offsets = [0, 0], sizes = [8, 32], strides = [1, 1]} : vector<8x96xf32> to vector<8x32xf32>
    %263 = arith.addf %261, %262 : vector<8x32xf32>
    %264 = arith.negf %263 : vector<8x32xf32>
    %265 = math.exp %264 : vector<8x32xf32>
    %cst_50 = arith.constant 1.000000e+00 : f32
    %266 = vector.broadcast %cst_50 : f32 to vector<8x32xf32>
    %267 = arith.addf %266, %265 : vector<8x32xf32>
    %268 = arith.divf %266, %267 : vector<8x32xf32>
    %269 = vector.extract_strided_slice %258 {offsets = [0, 32], sizes = [8, 32], strides = [1, 1]} : vector<8x96xf32> to vector<8x32xf32>
    %270 = vector.extract_strided_slice %260 {offsets = [0, 32], sizes = [8, 32], strides = [1, 1]} : vector<8x96xf32> to vector<8x32xf32>
    %271 = arith.addf %269, %270 : vector<8x32xf32>
    %272 = arith.negf %271 : vector<8x32xf32>
    %273 = math.exp %272 : vector<8x32xf32>
    %cst_51 = arith.constant 1.000000e+00 : f32
    %274 = vector.broadcast %cst_51 : f32 to vector<8x32xf32>
    %275 = arith.addf %274, %273 : vector<8x32xf32>
    %276 = arith.divf %274, %275 : vector<8x32xf32>
    %277 = vector.extract_strided_slice %258 {offsets = [0, 64], sizes = [8, 32], strides = [1, 1]} : vector<8x96xf32> to vector<8x32xf32>
    %278 = vector.extract_strided_slice %260 {offsets = [0, 64], sizes = [8, 32], strides = [1, 1]} : vector<8x96xf32> to vector<8x32xf32>
    %279 = arith.mulf %268, %278 : vector<8x32xf32>
    %280 = arith.addf %277, %279 : vector<8x32xf32>
    %281 = math.tanh %280 : vector<8x32xf32>
    %cst_52 = arith.constant 1.000000e+00 : f32
    %282 = vector.broadcast %cst_52 : f32 to vector<8x32xf32>
    %283 = arith.subf %282, %276 : vector<8x32xf32>
    %284 = arith.mulf %283, %281 : vector<8x32xf32>
    %285 = arith.mulf %276, %256 : vector<8x32xf32>
    %286 = arith.addf %284, %285 : vector<8x32xf32>
    %287 = arith.truncf %286 : vector<8x32xf32> to vector<8x32xbf16>
    %cst_53 = arith.constant dense<0.000000e+00> : vector<8x64xf32>
    %288 = tpu.matmul %287, %3, %cst_53 {dimension_numbers = #tpu.dot_dimension_numbers<[1], [0], [0], [1], [0, 0, 1, 1], [], []>} : vector<8x32xbf16>, vector<32x64xbf16>, vector<8x64xf32> -> vector<8x64xf32>
    %289 = arith.addf %288, %12 : vector<8x64xf32>
    %cst_54 = arith.constant dense<0.000000e+00> : vector<8x256xf32>
    %290 = tpu.matmul %287, %2, %cst_54 {dimension_numbers = #tpu.dot_dimension_numbers<[1], [0], [0], [1], [0, 0, 1, 1], [], []>} : vector<8x32xbf16>, vector<32x256xbf16>, vector<8x256xf32> -> vector<8x256xf32>
    %291 = vector.extract_strided_slice %290 {offsets = [0, 0], sizes = [8, 96], strides = [1, 1]} : vector<8x256xf32> to vector<8x96xf32>
    %292 = arith.addf %291, %9 : vector<8x96xf32>
    %293 = vector.extract_strided_slice %290 {offsets = [0, 128], sizes = [8, 96], strides = [1, 1]} : vector<8x256xf32> to vector<8x96xf32>
    %294 = arith.addf %293, %6 : vector<8x96xf32>
    %295 = vector.extract_strided_slice %292 {offsets = [0, 0], sizes = [8, 32], strides = [1, 1]} : vector<8x96xf32> to vector<8x32xf32>
    %296 = vector.extract_strided_slice %294 {offsets = [0, 0], sizes = [8, 32], strides = [1, 1]} : vector<8x96xf32> to vector<8x32xf32>
    %297 = arith.addf %295, %296 : vector<8x32xf32>
    %298 = arith.negf %297 : vector<8x32xf32>
    %299 = math.exp %298 : vector<8x32xf32>
    %cst_55 = arith.constant 1.000000e+00 : f32
    %300 = vector.broadcast %cst_55 : f32 to vector<8x32xf32>
    %301 = arith.addf %300, %299 : vector<8x32xf32>
    %302 = arith.divf %300, %301 : vector<8x32xf32>
    %303 = vector.extract_strided_slice %292 {offsets = [0, 32], sizes = [8, 32], strides = [1, 1]} : vector<8x96xf32> to vector<8x32xf32>
    %304 = vector.extract_strided_slice %294 {offsets = [0, 32], sizes = [8, 32], strides = [1, 1]} : vector<8x96xf32> to vector<8x32xf32>
    %305 = arith.addf %303, %304 : vector<8x32xf32>
    %306 = arith.negf %305 : vector<8x32xf32>
    %307 = math.exp %306 : vector<8x32xf32>
    %cst_56 = arith.constant 1.000000e+00 : f32
    %308 = vector.broadcast %cst_56 : f32 to vector<8x32xf32>
    %309 = arith.addf %308, %307 : vector<8x32xf32>
    %310 = arith.divf %308, %309 : vector<8x32xf32>
    %311 = vector.extract_strided_slice %292 {offsets = [0, 64], sizes = [8, 32], strides = [1, 1]} : vector<8x96xf32> to vector<8x32xf32>
    %312 = vector.extract_strided_slice %294 {offsets = [0, 64], sizes = [8, 32], strides = [1, 1]} : vector<8x96xf32> to vector<8x32xf32>
    %313 = arith.mulf %302, %312 : vector<8x32xf32>
    %314 = arith.addf %311, %313 : vector<8x32xf32>
    %315 = math.tanh %314 : vector<8x32xf32>
    %cst_57 = arith.constant 1.000000e+00 : f32
    %316 = vector.broadcast %cst_57 : f32 to vector<8x32xf32>
    %317 = arith.subf %316, %310 : vector<8x32xf32>
    %318 = arith.mulf %317, %315 : vector<8x32xf32>
    %319 = arith.mulf %310, %286 : vector<8x32xf32>
    %320 = arith.addf %318, %319 : vector<8x32xf32>
    %321 = arith.truncf %320 : vector<8x32xf32> to vector<8x32xbf16>
    %cst_58 = arith.constant dense<0.000000e+00> : vector<8x64xf32>
    %322 = tpu.matmul %321, %3, %cst_58 {dimension_numbers = #tpu.dot_dimension_numbers<[1], [0], [0], [1], [0, 0, 1, 1], [], []>} : vector<8x32xbf16>, vector<32x64xbf16>, vector<8x64xf32> -> vector<8x64xf32>
    %323 = arith.addf %322, %12 : vector<8x64xf32>
    %cst_59 = arith.constant dense<0.000000e+00> : vector<8x256xf32>
    %324 = tpu.matmul %321, %2, %cst_59 {dimension_numbers = #tpu.dot_dimension_numbers<[1], [0], [0], [1], [0, 0, 1, 1], [], []>} : vector<8x32xbf16>, vector<32x256xbf16>, vector<8x256xf32> -> vector<8x256xf32>
    %325 = vector.extract_strided_slice %324 {offsets = [0, 0], sizes = [8, 96], strides = [1, 1]} : vector<8x256xf32> to vector<8x96xf32>
    %326 = arith.addf %325, %9 : vector<8x96xf32>
    %327 = vector.extract_strided_slice %324 {offsets = [0, 128], sizes = [8, 96], strides = [1, 1]} : vector<8x256xf32> to vector<8x96xf32>
    %328 = arith.addf %327, %6 : vector<8x96xf32>
    %329 = vector.extract_strided_slice %326 {offsets = [0, 0], sizes = [8, 32], strides = [1, 1]} : vector<8x96xf32> to vector<8x32xf32>
    %330 = vector.extract_strided_slice %328 {offsets = [0, 0], sizes = [8, 32], strides = [1, 1]} : vector<8x96xf32> to vector<8x32xf32>
    %331 = arith.addf %329, %330 : vector<8x32xf32>
    %332 = arith.negf %331 : vector<8x32xf32>
    %333 = math.exp %332 : vector<8x32xf32>
    %cst_60 = arith.constant 1.000000e+00 : f32
    %334 = vector.broadcast %cst_60 : f32 to vector<8x32xf32>
    %335 = arith.addf %334, %333 : vector<8x32xf32>
    %336 = arith.divf %334, %335 : vector<8x32xf32>
    %337 = vector.extract_strided_slice %326 {offsets = [0, 32], sizes = [8, 32], strides = [1, 1]} : vector<8x96xf32> to vector<8x32xf32>
    %338 = vector.extract_strided_slice %328 {offsets = [0, 32], sizes = [8, 32], strides = [1, 1]} : vector<8x96xf32> to vector<8x32xf32>
    %339 = arith.addf %337, %338 : vector<8x32xf32>
    %340 = arith.negf %339 : vector<8x32xf32>
    %341 = math.exp %340 : vector<8x32xf32>
    %cst_61 = arith.constant 1.000000e+00 : f32
    %342 = vector.broadcast %cst_61 : f32 to vector<8x32xf32>
    %343 = arith.addf %342, %341 : vector<8x32xf32>
    %344 = arith.divf %342, %343 : vector<8x32xf32>
    %345 = vector.extract_strided_slice %326 {offsets = [0, 64], sizes = [8, 32], strides = [1, 1]} : vector<8x96xf32> to vector<8x32xf32>
    %346 = vector.extract_strided_slice %328 {offsets = [0, 64], sizes = [8, 32], strides = [1, 1]} : vector<8x96xf32> to vector<8x32xf32>
    %347 = arith.mulf %336, %346 : vector<8x32xf32>
    %348 = arith.addf %345, %347 : vector<8x32xf32>
    %349 = math.tanh %348 : vector<8x32xf32>
    %cst_62 = arith.constant 1.000000e+00 : f32
    %350 = vector.broadcast %cst_62 : f32 to vector<8x32xf32>
    %351 = arith.subf %350, %344 : vector<8x32xf32>
    %352 = arith.mulf %351, %349 : vector<8x32xf32>
    %353 = arith.mulf %344, %320 : vector<8x32xf32>
    %354 = arith.addf %352, %353 : vector<8x32xf32>
    %355 = arith.truncf %354 : vector<8x32xf32> to vector<8x32xbf16>
    %cst_63 = arith.constant dense<0.000000e+00> : vector<8x64xf32>
    %356 = tpu.matmul %355, %3, %cst_63 {dimension_numbers = #tpu.dot_dimension_numbers<[1], [0], [0], [1], [0, 0, 1, 1], [], []>} : vector<8x32xbf16>, vector<32x64xbf16>, vector<8x64xf32> -> vector<8x64xf32>
    %357 = arith.addf %356, %12 : vector<8x64xf32>
    %cst_64 = arith.constant dense<0.000000e+00> : vector<8x256xf32>
    %358 = tpu.matmul %355, %2, %cst_64 {dimension_numbers = #tpu.dot_dimension_numbers<[1], [0], [0], [1], [0, 0, 1, 1], [], []>} : vector<8x32xbf16>, vector<32x256xbf16>, vector<8x256xf32> -> vector<8x256xf32>
    %359 = vector.extract_strided_slice %358 {offsets = [0, 0], sizes = [8, 96], strides = [1, 1]} : vector<8x256xf32> to vector<8x96xf32>
    %360 = arith.addf %359, %9 : vector<8x96xf32>
    %361 = vector.extract_strided_slice %358 {offsets = [0, 128], sizes = [8, 96], strides = [1, 1]} : vector<8x256xf32> to vector<8x96xf32>
    %362 = arith.addf %361, %6 : vector<8x96xf32>
    %363 = vector.extract_strided_slice %360 {offsets = [0, 0], sizes = [8, 32], strides = [1, 1]} : vector<8x96xf32> to vector<8x32xf32>
    %364 = vector.extract_strided_slice %362 {offsets = [0, 0], sizes = [8, 32], strides = [1, 1]} : vector<8x96xf32> to vector<8x32xf32>
    %365 = arith.addf %363, %364 : vector<8x32xf32>
    %366 = arith.negf %365 : vector<8x32xf32>
    %367 = math.exp %366 : vector<8x32xf32>
    %cst_65 = arith.constant 1.000000e+00 : f32
    %368 = vector.broadcast %cst_65 : f32 to vector<8x32xf32>
    %369 = arith.addf %368, %367 : vector<8x32xf32>
    %370 = arith.divf %368, %369 : vector<8x32xf32>
    %371 = vector.extract_strided_slice %360 {offsets = [0, 32], sizes = [8, 32], strides = [1, 1]} : vector<8x96xf32> to vector<8x32xf32>
    %372 = vector.extract_strided_slice %362 {offsets = [0, 32], sizes = [8, 32], strides = [1, 1]} : vector<8x96xf32> to vector<8x32xf32>
    %373 = arith.addf %371, %372 : vector<8x32xf32>
    %374 = arith.negf %373 : vector<8x32xf32>
    %375 = math.exp %374 : vector<8x32xf32>
    %cst_66 = arith.constant 1.000000e+00 : f32
    %376 = vector.broadcast %cst_66 : f32 to vector<8x32xf32>
    %377 = arith.addf %376, %375 : vector<8x32xf32>
    %378 = arith.divf %376, %377 : vector<8x32xf32>
    %379 = vector.extract_strided_slice %360 {offsets = [0, 64], sizes = [8, 32], strides = [1, 1]} : vector<8x96xf32> to vector<8x32xf32>
    %380 = vector.extract_strided_slice %362 {offsets = [0, 64], sizes = [8, 32], strides = [1, 1]} : vector<8x96xf32> to vector<8x32xf32>
    %381 = arith.mulf %370, %380 : vector<8x32xf32>
    %382 = arith.addf %379, %381 : vector<8x32xf32>
    %383 = math.tanh %382 : vector<8x32xf32>
    %cst_67 = arith.constant 1.000000e+00 : f32
    %384 = vector.broadcast %cst_67 : f32 to vector<8x32xf32>
    %385 = arith.subf %384, %378 : vector<8x32xf32>
    %386 = arith.mulf %385, %383 : vector<8x32xf32>
    %387 = arith.mulf %378, %354 : vector<8x32xf32>
    %388 = arith.addf %386, %387 : vector<8x32xf32>
    %389 = arith.truncf %388 : vector<8x32xf32> to vector<8x32xbf16>
    %cst_68 = arith.constant dense<0.000000e+00> : vector<8x64xf32>
    %390 = tpu.matmul %389, %3, %cst_68 {dimension_numbers = #tpu.dot_dimension_numbers<[1], [0], [0], [1], [0, 0, 1, 1], [], []>} : vector<8x32xbf16>, vector<32x64xbf16>, vector<8x64xf32> -> vector<8x64xf32>
    %391 = arith.addf %390, %12 : vector<8x64xf32>
    %cst_69 = arith.constant dense<0.000000e+00> : vector<8x256xf32>
    %392 = tpu.matmul %389, %2, %cst_69 {dimension_numbers = #tpu.dot_dimension_numbers<[1], [0], [0], [1], [0, 0, 1, 1], [], []>} : vector<8x32xbf16>, vector<32x256xbf16>, vector<8x256xf32> -> vector<8x256xf32>
    %393 = vector.extract_strided_slice %392 {offsets = [0, 0], sizes = [8, 96], strides = [1, 1]} : vector<8x256xf32> to vector<8x96xf32>
    %394 = arith.addf %393, %9 : vector<8x96xf32>
    %395 = vector.extract_strided_slice %392 {offsets = [0, 128], sizes = [8, 96], strides = [1, 1]} : vector<8x256xf32> to vector<8x96xf32>
    %396 = arith.addf %395, %6 : vector<8x96xf32>
    %397 = vector.extract_strided_slice %394 {offsets = [0, 0], sizes = [8, 32], strides = [1, 1]} : vector<8x96xf32> to vector<8x32xf32>
    %398 = vector.extract_strided_slice %396 {offsets = [0, 0], sizes = [8, 32], strides = [1, 1]} : vector<8x96xf32> to vector<8x32xf32>
    %399 = arith.addf %397, %398 : vector<8x32xf32>
    %400 = arith.negf %399 : vector<8x32xf32>
    %401 = math.exp %400 : vector<8x32xf32>
    %cst_70 = arith.constant 1.000000e+00 : f32
    %402 = vector.broadcast %cst_70 : f32 to vector<8x32xf32>
    %403 = arith.addf %402, %401 : vector<8x32xf32>
    %404 = arith.divf %402, %403 : vector<8x32xf32>
    %405 = vector.extract_strided_slice %394 {offsets = [0, 32], sizes = [8, 32], strides = [1, 1]} : vector<8x96xf32> to vector<8x32xf32>
    %406 = vector.extract_strided_slice %396 {offsets = [0, 32], sizes = [8, 32], strides = [1, 1]} : vector<8x96xf32> to vector<8x32xf32>
    %407 = arith.addf %405, %406 : vector<8x32xf32>
    %408 = arith.negf %407 : vector<8x32xf32>
    %409 = math.exp %408 : vector<8x32xf32>
    %cst_71 = arith.constant 1.000000e+00 : f32
    %410 = vector.broadcast %cst_71 : f32 to vector<8x32xf32>
    %411 = arith.addf %410, %409 : vector<8x32xf32>
    %412 = arith.divf %410, %411 : vector<8x32xf32>
    %413 = vector.extract_strided_slice %394 {offsets = [0, 64], sizes = [8, 32], strides = [1, 1]} : vector<8x96xf32> to vector<8x32xf32>
    %414 = vector.extract_strided_slice %396 {offsets = [0, 64], sizes = [8, 32], strides = [1, 1]} : vector<8x96xf32> to vector<8x32xf32>
    %415 = arith.mulf %404, %414 : vector<8x32xf32>
    %416 = arith.addf %413, %415 : vector<8x32xf32>
    %417 = math.tanh %416 : vector<8x32xf32>
    %cst_72 = arith.constant 1.000000e+00 : f32
    %418 = vector.broadcast %cst_72 : f32 to vector<8x32xf32>
    %419 = arith.subf %418, %412 : vector<8x32xf32>
    %420 = arith.mulf %419, %417 : vector<8x32xf32>
    %421 = arith.mulf %412, %388 : vector<8x32xf32>
    %422 = arith.addf %420, %421 : vector<8x32xf32>
    %423 = arith.truncf %422 : vector<8x32xf32> to vector<8x32xbf16>
    %cst_73 = arith.constant dense<0.000000e+00> : vector<8x64xf32>
    %424 = tpu.matmul %423, %3, %cst_73 {dimension_numbers = #tpu.dot_dimension_numbers<[1], [0], [0], [1], [0, 0, 1, 1], [], []>} : vector<8x32xbf16>, vector<32x64xbf16>, vector<8x64xf32> -> vector<8x64xf32>
    %425 = arith.addf %424, %12 : vector<8x64xf32>
    %cst_74 = arith.constant dense<0.000000e+00> : vector<8x256xf32>
    %426 = tpu.matmul %423, %2, %cst_74 {dimension_numbers = #tpu.dot_dimension_numbers<[1], [0], [0], [1], [0, 0, 1, 1], [], []>} : vector<8x32xbf16>, vector<32x256xbf16>, vector<8x256xf32> -> vector<8x256xf32>
    %427 = vector.extract_strided_slice %426 {offsets = [0, 0], sizes = [8, 96], strides = [1, 1]} : vector<8x256xf32> to vector<8x96xf32>
    %428 = arith.addf %427, %9 : vector<8x96xf32>
    %429 = vector.extract_strided_slice %426 {offsets = [0, 128], sizes = [8, 96], strides = [1, 1]} : vector<8x256xf32> to vector<8x96xf32>
    %430 = arith.addf %429, %6 : vector<8x96xf32>
    %431 = vector.extract_strided_slice %428 {offsets = [0, 0], sizes = [8, 32], strides = [1, 1]} : vector<8x96xf32> to vector<8x32xf32>
    %432 = vector.extract_strided_slice %430 {offsets = [0, 0], sizes = [8, 32], strides = [1, 1]} : vector<8x96xf32> to vector<8x32xf32>
    %433 = arith.addf %431, %432 : vector<8x32xf32>
    %434 = arith.negf %433 : vector<8x32xf32>
    %435 = math.exp %434 : vector<8x32xf32>
    %cst_75 = arith.constant 1.000000e+00 : f32
    %436 = vector.broadcast %cst_75 : f32 to vector<8x32xf32>
    %437 = arith.addf %436, %435 : vector<8x32xf32>
    %438 = arith.divf %436, %437 : vector<8x32xf32>
    %439 = vector.extract_strided_slice %428 {offsets = [0, 32], sizes = [8, 32], strides = [1, 1]} : vector<8x96xf32> to vector<8x32xf32>
    %440 = vector.extract_strided_slice %430 {offsets = [0, 32], sizes = [8, 32], strides = [1, 1]} : vector<8x96xf32> to vector<8x32xf32>
    %441 = arith.addf %439, %440 : vector<8x32xf32>
    %442 = arith.negf %441 : vector<8x32xf32>
    %443 = math.exp %442 : vector<8x32xf32>
    %cst_76 = arith.constant 1.000000e+00 : f32
    %444 = vector.broadcast %cst_76 : f32 to vector<8x32xf32>
    %445 = arith.addf %444, %443 : vector<8x32xf32>
    %446 = arith.divf %444, %445 : vector<8x32xf32>
    %447 = vector.extract_strided_slice %428 {offsets = [0, 64], sizes = [8, 32], strides = [1, 1]} : vector<8x96xf32> to vector<8x32xf32>
    %448 = vector.extract_strided_slice %430 {offsets = [0, 64], sizes = [8, 32], strides = [1, 1]} : vector<8x96xf32> to vector<8x32xf32>
    %449 = arith.mulf %438, %448 : vector<8x32xf32>
    %450 = arith.addf %447, %449 : vector<8x32xf32>
    %451 = math.tanh %450 : vector<8x32xf32>
    %cst_77 = arith.constant 1.000000e+00 : f32
    %452 = vector.broadcast %cst_77 : f32 to vector<8x32xf32>
    %453 = arith.subf %452, %446 : vector<8x32xf32>
    %454 = arith.mulf %453, %451 : vector<8x32xf32>
    %455 = arith.mulf %446, %422 : vector<8x32xf32>
    %456 = arith.addf %454, %455 : vector<8x32xf32>
    %457 = arith.truncf %456 : vector<8x32xf32> to vector<8x32xbf16>
    %cst_78 = arith.constant dense<0.000000e+00> : vector<8x64xf32>
    %458 = tpu.matmul %457, %3, %cst_78 {dimension_numbers = #tpu.dot_dimension_numbers<[1], [0], [0], [1], [0, 0, 1, 1], [], []>} : vector<8x32xbf16>, vector<32x64xbf16>, vector<8x64xf32> -> vector<8x64xf32>
    %459 = arith.addf %458, %12 : vector<8x64xf32>
    %cst_79 = arith.constant dense<0.000000e+00> : vector<8x256xf32>
    %460 = tpu.matmul %457, %2, %cst_79 {dimension_numbers = #tpu.dot_dimension_numbers<[1], [0], [0], [1], [0, 0, 1, 1], [], []>} : vector<8x32xbf16>, vector<32x256xbf16>, vector<8x256xf32> -> vector<8x256xf32>
    %461 = vector.extract_strided_slice %460 {offsets = [0, 0], sizes = [8, 96], strides = [1, 1]} : vector<8x256xf32> to vector<8x96xf32>
    %462 = arith.addf %461, %9 : vector<8x96xf32>
    %463 = vector.extract_strided_slice %460 {offsets = [0, 128], sizes = [8, 96], strides = [1, 1]} : vector<8x256xf32> to vector<8x96xf32>
    %464 = arith.addf %463, %6 : vector<8x96xf32>
    %465 = vector.extract_strided_slice %462 {offsets = [0, 0], sizes = [8, 32], strides = [1, 1]} : vector<8x96xf32> to vector<8x32xf32>
    %466 = vector.extract_strided_slice %464 {offsets = [0, 0], sizes = [8, 32], strides = [1, 1]} : vector<8x96xf32> to vector<8x32xf32>
    %467 = arith.addf %465, %466 : vector<8x32xf32>
    %468 = arith.negf %467 : vector<8x32xf32>
    %469 = math.exp %468 : vector<8x32xf32>
    %cst_80 = arith.constant 1.000000e+00 : f32
    %470 = vector.broadcast %cst_80 : f32 to vector<8x32xf32>
    %471 = arith.addf %470, %469 : vector<8x32xf32>
    %472 = arith.divf %470, %471 : vector<8x32xf32>
    %473 = vector.extract_strided_slice %462 {offsets = [0, 32], sizes = [8, 32], strides = [1, 1]} : vector<8x96xf32> to vector<8x32xf32>
    %474 = vector.extract_strided_slice %464 {offsets = [0, 32], sizes = [8, 32], strides = [1, 1]} : vector<8x96xf32> to vector<8x32xf32>
    %475 = arith.addf %473, %474 : vector<8x32xf32>
    %476 = arith.negf %475 : vector<8x32xf32>
    %477 = math.exp %476 : vector<8x32xf32>
    %cst_81 = arith.constant 1.000000e+00 : f32
    %478 = vector.broadcast %cst_81 : f32 to vector<8x32xf32>
    %479 = arith.addf %478, %477 : vector<8x32xf32>
    %480 = arith.divf %478, %479 : vector<8x32xf32>
    %481 = vector.extract_strided_slice %462 {offsets = [0, 64], sizes = [8, 32], strides = [1, 1]} : vector<8x96xf32> to vector<8x32xf32>
    %482 = vector.extract_strided_slice %464 {offsets = [0, 64], sizes = [8, 32], strides = [1, 1]} : vector<8x96xf32> to vector<8x32xf32>
    %483 = arith.mulf %472, %482 : vector<8x32xf32>
    %484 = arith.addf %481, %483 : vector<8x32xf32>
    %485 = math.tanh %484 : vector<8x32xf32>
    %cst_82 = arith.constant 1.000000e+00 : f32
    %486 = vector.broadcast %cst_82 : f32 to vector<8x32xf32>
    %487 = arith.subf %486, %480 : vector<8x32xf32>
    %488 = arith.mulf %487, %485 : vector<8x32xf32>
    %489 = arith.mulf %480, %456 : vector<8x32xf32>
    %490 = arith.addf %488, %489 : vector<8x32xf32>
    %491 = arith.truncf %490 : vector<8x32xf32> to vector<8x32xbf16>
    %cst_83 = arith.constant dense<0.000000e+00> : vector<8x64xf32>
    %492 = tpu.matmul %491, %3, %cst_83 {dimension_numbers = #tpu.dot_dimension_numbers<[1], [0], [0], [1], [0, 0, 1, 1], [], []>} : vector<8x32xbf16>, vector<32x64xbf16>, vector<8x64xf32> -> vector<8x64xf32>
    %493 = arith.addf %492, %12 : vector<8x64xf32>
    %cst_84 = arith.constant dense<0.000000e+00> : vector<8x256xf32>
    %494 = tpu.matmul %491, %2, %cst_84 {dimension_numbers = #tpu.dot_dimension_numbers<[1], [0], [0], [1], [0, 0, 1, 1], [], []>} : vector<8x32xbf16>, vector<32x256xbf16>, vector<8x256xf32> -> vector<8x256xf32>
    %495 = vector.extract_strided_slice %494 {offsets = [0, 0], sizes = [8, 96], strides = [1, 1]} : vector<8x256xf32> to vector<8x96xf32>
    %496 = arith.addf %495, %9 : vector<8x96xf32>
    %497 = vector.extract_strided_slice %494 {offsets = [0, 128], sizes = [8, 96], strides = [1, 1]} : vector<8x256xf32> to vector<8x96xf32>
    %498 = arith.addf %497, %6 : vector<8x96xf32>
    %499 = vector.extract_strided_slice %496 {offsets = [0, 0], sizes = [8, 32], strides = [1, 1]} : vector<8x96xf32> to vector<8x32xf32>
    %500 = vector.extract_strided_slice %498 {offsets = [0, 0], sizes = [8, 32], strides = [1, 1]} : vector<8x96xf32> to vector<8x32xf32>
    %501 = arith.addf %499, %500 : vector<8x32xf32>
    %502 = arith.negf %501 : vector<8x32xf32>
    %503 = math.exp %502 : vector<8x32xf32>
    %cst_85 = arith.constant 1.000000e+00 : f32
    %504 = vector.broadcast %cst_85 : f32 to vector<8x32xf32>
    %505 = arith.addf %504, %503 : vector<8x32xf32>
    %506 = arith.divf %504, %505 : vector<8x32xf32>
    %507 = vector.extract_strided_slice %496 {offsets = [0, 32], sizes = [8, 32], strides = [1, 1]} : vector<8x96xf32> to vector<8x32xf32>
    %508 = vector.extract_strided_slice %498 {offsets = [0, 32], sizes = [8, 32], strides = [1, 1]} : vector<8x96xf32> to vector<8x32xf32>
    %509 = arith.addf %507, %508 : vector<8x32xf32>
    %510 = arith.negf %509 : vector<8x32xf32>
    %511 = math.exp %510 : vector<8x32xf32>
    %cst_86 = arith.constant 1.000000e+00 : f32
    %512 = vector.broadcast %cst_86 : f32 to vector<8x32xf32>
    %513 = arith.addf %512, %511 : vector<8x32xf32>
    %514 = arith.divf %512, %513 : vector<8x32xf32>
    %515 = vector.extract_strided_slice %496 {offsets = [0, 64], sizes = [8, 32], strides = [1, 1]} : vector<8x96xf32> to vector<8x32xf32>
    %516 = vector.extract_strided_slice %498 {offsets = [0, 64], sizes = [8, 32], strides = [1, 1]} : vector<8x96xf32> to vector<8x32xf32>
    %517 = arith.mulf %506, %516 : vector<8x32xf32>
    %518 = arith.addf %515, %517 : vector<8x32xf32>
    %519 = math.tanh %518 : vector<8x32xf32>
    %cst_87 = arith.constant 1.000000e+00 : f32
    %520 = vector.broadcast %cst_87 : f32 to vector<8x32xf32>
    %521 = arith.subf %520, %514 : vector<8x32xf32>
    %522 = arith.mulf %521, %519 : vector<8x32xf32>
    %523 = arith.mulf %514, %490 : vector<8x32xf32>
    %524 = arith.addf %522, %523 : vector<8x32xf32>
    %525 = arith.truncf %524 : vector<8x32xf32> to vector<8x32xbf16>
    %cst_88 = arith.constant dense<0.000000e+00> : vector<8x64xf32>
    %526 = tpu.matmul %525, %3, %cst_88 {dimension_numbers = #tpu.dot_dimension_numbers<[1], [0], [0], [1], [0, 0, 1, 1], [], []>} : vector<8x32xbf16>, vector<32x64xbf16>, vector<8x64xf32> -> vector<8x64xf32>
    %527 = arith.addf %526, %12 : vector<8x64xf32>
    %528 = tpu.concatenate %289, %323, %357, %391, %425, %459, %493, %527 in 1 : vector<8x64xf32>, vector<8x64xf32>, vector<8x64xf32>, vector<8x64xf32>, vector<8x64xf32>, vector<8x64xf32>, vector<8x64xf32>, vector<8x64xf32> -> vector<8x512xf32>
    %c0_89 = arith.constant 0 : index
    %c0_90 = arith.constant 0 : index
    %529 = vector.load %arg9[%c0_89, %c0_90] : memref<8x512xf32, #tpu.memory_space<vmem>>, vector<8x512xf32>
    tpu.vector_store %arg9[%c0_89, %c0_90], %528 {strides = array<i32>} : memref<8x512xf32, #tpu.memory_space<vmem>>, vector<8x512xf32>,
    return
  }
}

</mosaic_0001>

<llo_original>
// kernel: seq2seq_forward.1
$region0: #{seq2seq_forward.1}
  #allocation0 [shape = 'u32[]', space=smem, size = 0x4, offset = 0x4, fixed_abs, tag = 'smem constant byte address 0x4 - core index']
  #allocation1 [shape = 'u32[144,128]{1,0:T(1,128)}', space=vmem, size = 0x12000, scoped, tag = 'internal scratch']
  %s0 = inlined_call_operand.vmem [shape: bf16[72,64], index: 0, kind: input, shape index: {}]
  %s1 = inlined_call_operand.vmem [shape: bf16[64,96], index: 1, kind: input, shape index: {}]
  %s2 = inlined_call_operand.vmem [shape: bf16[32,96], index: 2, kind: input, shape index: {}]
  %s3 = inlined_call_operand.vmem [shape: f32[1,96], index: 3, kind: input, shape index: {}]
  %s4 = inlined_call_operand.vmem [shape: f32[1,96], index: 4, kind: input, shape index: {}]
  %s5 = inlined_call_operand.vmem [shape: bf16[32,256], index: 5, kind: input, shape index: {}]
  %s6 = inlined_call_operand.vmem [shape: f32[1,96], index: 6, kind: input, shape index: {}]
  %s7 = inlined_call_operand.vmem [shape: bf16[32,64], index: 7, kind: input, shape index: {}]
  %s8 = inlined_call_operand.vmem [shape: f32[1,64], index: 8, kind: input, shape index: {}]
  %s9 = inlined_call_operand.vmem [shape: f32[8,512], index: 9, kind: output, shape index: {}]
  %s10 = sld [smem:[#allocation0]]
  $region46: #{seq2seq_forward.1} parent=0
    _
  %s12 = ssub.s32 1, %s10
  %s13 = scalar_select 0, %s12, %s10
  // Predicated region
  $region2: #{seq2seq_forward.1} parent=0 // pred_check
    _
  $region3: #{seq2seq_forward.1} parent=0 // pred_check_branch
    %15 = sbr.rel (0) target = $region5
  $region4: #{seq2seq_forward.1} parent=0 // pred_region
    _
  $region5: #{seq2seq_forward.1} parent=0 // pred_fallthru
    _
  // Predicated region
  $region6: #{seq2seq_forward.1} parent=0 // pred_check
    _
  $region7: #{seq2seq_forward.1} parent=0 // pred_check_branch
    %17 = sbr.rel (0) target = $region9
  $region8: #{seq2seq_forward.1} parent=0 // pred_region
    _
  $region9: #{seq2seq_forward.1} parent=0 // pred_fallthru
    _
  // Predicated region
  $region10: #{seq2seq_forward.1} parent=0 // pred_check
    _
  $region11: #{seq2seq_forward.1} parent=0 // pred_check_branch
    %19 = sbr.rel (0) target = $region13
  $region12: #{seq2seq_forward.1} parent=0 // pred_region
    _
  $region13: #{seq2seq_forward.1} parent=0 // pred_fallthru
    _
  // Predicated region
  $region14: #{seq2seq_forward.1} parent=0 // pred_check
    _
  $region15: #{seq2seq_forward.1} parent=0 // pred_check_branch
    %21 = sbr.rel (0) target = $region17
  $region16: #{seq2seq_forward.1} parent=0 // pred_region
    _
  $region17: #{seq2seq_forward.1} parent=0 // pred_fallthru
    _
  // Predicated region
  $region18: #{seq2seq_forward.1} parent=0 // pred_check
    _
  $region19: #{seq2seq_forward.1} parent=0 // pred_check_branch
    %23 = sbr.rel (0) target = $region21
  $region20: #{seq2seq_forward.1} parent=0 // pred_region
    _
  $region21: #{seq2seq_forward.1} parent=0 // pred_fallthru
    _
  // Predicated region
  $region22: #{seq2seq_forward.1} parent=0 // pred_check
    _
  $region23: #{seq2seq_forward.1} parent=0 // pred_check_branch
    %25 = sbr.rel (0) target = $region25
  $region24: #{seq2seq_forward.1} parent=0 // pred_region
    _
  $region25: #{seq2seq_forward.1} parent=0 // pred_fallthru
    _
  // Predicated region
  $region26: #{seq2seq_forward.1} parent=0 // pred_check
    _
  $region27: #{seq2seq_forward.1} parent=0 // pred_check_branch
    %27 = sbr.rel (0) target = $region29
  $region28: #{seq2seq_forward.1} parent=0 // pred_region
    _
  $region29: #{seq2seq_forward.1} parent=0 // pred_fallthru
    _
  // Predicated region
  $region30: #{seq2seq_forward.1} parent=0 // pred_check
    _
  $region31: #{seq2seq_forward.1} parent=0 // pred_check_branch
    %29 = sbr.rel (0) target = $region33
  $region32: #{seq2seq_forward.1} parent=0 // pred_region
    _
  $region33: #{seq2seq_forward.1} parent=0 // pred_fallthru
    _
  // Predicated region
  $region34: #{seq2seq_forward.1} parent=0 // pred_check
    _
  $region35: #{seq2seq_forward.1} parent=0 // pred_check_branch
    %31 = sbr.rel (0) target = $region37
  $region36: #{seq2seq_forward.1} parent=0 // pred_region
    _
  $region37: #{seq2seq_forward.1} parent=0 // pred_fallthru
    _
  %v33 = vld [vmem:[%s1] sm:$0xf]
  %v34 = vld [vmem:[%s1 + $0x4] sm:$0xf]
  %v35 = vld [vmem:[%s1 + $0x8] sm:$0xf]
  %v36 = vld [vmem:[%s1 + $0xc] sm:$0xf]
  %v37 = vld [vmem:[%s1 + $0x10] sm:$0xf]
  %v38 = vld [vmem:[%s1 + $0x14] sm:$0xf]
  %v39 = vld [vmem:[%s1 + $0x18] sm:$0xf]
  %v40 = vld [vmem:[%s1 + $0x1c] sm:$0xf]
  %v41 = vld [vmem:[%s2] sm:$0xf]
  %v42 = vld [vmem:[%s2 + $0x4] sm:$0xf]
  %v43 = vld [vmem:[%s2 + $0x8] sm:$0xf]
  %v44 = vld [vmem:[%s2 + $0xc] sm:$0xf]
  %v45 = vld [vmem:[%s5] sm:$0xff]
  %v46 = vld [vmem:[%s5 + $0x8] sm:$0xff]
  %v47 = vld [vmem:[%s5 + $0x10] sm:$0xff]
  %v48 = vld [vmem:[%s5 + $0x18] sm:$0xff]
  %v49 = vld [vmem:[%s7] sm:$0xf]
  %v50 = vld [vmem:[%s7 + $0x4] sm:$0xf]
  %v51 = vld [vmem:[%s7 + $0x8] sm:$0xf]
  %v52 = vld [vmem:[%s7 + $0xc] sm:$0xf]
  %v53 = vld [vmem:[%s4] sm:$0x1]
  %v55 = vlaneseq
  %v56 = vshrl.u32 %v55, 7
  %v57 = vsub.s32 0, %v56
  %v58 = vrot.slane %v53, %v57
  %v60 = vld [vmem:[%s6] sm:$0x1]
  %v62 = vlaneseq
  %v63 = vshrl.u32 %v62, 7
  %v64 = vsub.s32 0, %v63
  %v65 = vrot.slane %v60, %v64
  %v67 = vld [vmem:[%s8] sm:$0x1]
  %v69 = vlaneseq
  %v70 = vshrl.u32 %v69, 7
  %v71 = vsub.s32 0, %v70
  %v72 = vrot.slane %v67, %v71
  %v74 = vld [vmem:[%s0] sm:$0xf]
  %v75 = vld [vmem:[%s0 + $0x4] sm:$0xf]
  %v76 = vld [vmem:[%s0 + $0x8] sm:$0xf]
  %v77 = vld [vmem:[%s0 + $0xc] sm:$0xf]
  %v78 = vld [vmem:[%s0 + $0x10] sm:$0xf]
  %v79 = vld [vmem:[%s0 + $0x14] sm:$0xf]
  %v80 = vld [vmem:[%s0 + $0x18] sm:$0xf]
  %v81 = vld [vmem:[%s0 + $0x1c] sm:$0xf]
  %v82 = vld [vmem:[%s0 + $0x20] sm:$0xf]
  %v83 = vld [vmem:[%s3] sm:$0x1]
  %v85 = vlaneseq
  %v86 = vshrl.u32 %v85, 7
  %v87 = vsub.s32 0, %v86
  %v88 = vrot.slane %v83, %v87
  %v99 = vunpack.c.l.b16 %v74
  %v100 = vunpack.c.l.b16 %v75
  %v101 = vunpack.c.l.b16 %v76
  %v102 = vunpack.c.l.b16 %v77
  %v103 = vunpack.c.l.b16 %v78
  %v104 = vunpack.c.l.b16 %v79
  %v105 = vunpack.c.l.b16 %v80
  %v106 = vunpack.c.l.b16 %v81
  %v107 = vunpack.c.l.b16 %v82
  %v108 = vpack.c.b16 %v100, %v99
  %v109 = vpack.c.b16 %v102, %v101
  %v110 = vpack.c.b16 %v104, %v103
  %v111 = vpack.c.b16 %v106, %v105
  %v112 = vpack.c.b16 %v107, %v107
  %v121 = vunpack.c.l.b16 %v33
  %v122 = vunpack.c.l.b16 %v34
  %v123 = vunpack.c.l.b16 %v35
  %v124 = vunpack.c.l.b16 %v36
  %v125 = vunpack.c.l.b16 %v37
  %v126 = vunpack.c.l.b16 %v38
  %v127 = vunpack.c.l.b16 %v39
  %v128 = vunpack.c.l.b16 %v40
  %v129 = vpack.c.b16 %v122, %v121
  %v130 = vpack.c.b16 %v124, %v123
  %v131 = vpack.c.b16 %v126, %v125
  %v132 = vpack.c.b16 %v128, %v127
  %vm137 = vcmask 523264
  %v139 = vsel %vm137, %v108, 0
  %v142 = vsel %vm137, %v109, 0
  %v145 = vsel %vm137, %v110, 0
  %v148 = vsel %vm137, %v111, 0
  %v151 = vsel %vm137, %v112, 0
  %153 = vmatprep.subr.bf16.mxu0 0
  %154 = vmatpush1.bf16.msra.mxu0 %v129
  %155 = vmatprep.subr.bf16.mxu0 0
  %156 = vmatpush1.bf16.msra.mxu0 %v130
  %157 = vmatprep.subr.bf16.mxu0 0
  %158 = vmatpush1.bf16.msra.mxu0 %v131
  %159 = vmatprep.subr.bf16.mxu0 0
  %160 = vmatpush1.bf16.msra.mxu0 %v132
  %161 = vmatprep.subr.bf16.mxu0 0
  %162 = vmatpush1.bf16.msra.mxu0 0
  %163 = vmatprep.subr.bf16.mxu0 0
  %164 = vmatpush1.bf16.msra.mxu0 0
  %165 = vmatprep.subr.bf16.mxu0 0
  %166 = vmatpush1.bf16.msra.mxu0 0
  %167 = vmatprep.subr.bf16.mxu0 0
  %168 = vmatpush1.bf16.msra.mxu0 0
  %169 = vmatprep.subr.bf16.mxu0 0
  %170 = vmatpush1.bf16.msra.mxu0 0
  %171 = vmatprep.subr.bf16.mxu0 0
  %172 = vmatpush1.bf16.msra.mxu0 0
  %173 = vmatprep.subr.bf16.mxu0 0
  %174 = vmatpush1.bf16.msra.mxu0 0
  %175 = vmatprep.subr.bf16.mxu0 0
  %176 = vmatpush1.bf16.msra.mxu0 0
  %177 = vmatprep.subr.bf16.mxu0 0
  %178 = vmatpush1.bf16.msra.mxu0 0
  %179 = vmatprep.subr.bf16.mxu0 0
  %180 = vmatpush1.bf16.msra.mxu0 0
  %181 = vmatprep.subr.bf16.mxu0 0
  %182 = vmatpush1.bf16.msra.mxu0 0
  %183 = vmatprep.subr.bf16.mxu0 0
  %184 = vmatpush1.bf16.msra.mxu0 0
  %185 = vmatprep.mubr.bf16.mxu0 0
  %186 = vmatmul.mubr.bf16.gmra.mrb[0].mxu0 %v139
  %v187 = vpop.f32.mrb[0].mxu0
  %v188 = vadd.f32 %v88, %v187
  %v189 = vpop.f32.mrb[0].mxu0
  %v190 = vpop.f32.mrb[0].mxu0
  %v191 = vadd.f32 %v88, %v190
  %v192 = vpop.f32.mrb[0].mxu0
  %193 = vmatprep.mubr.bf16.mxu0 0
  %194 = vmatmul.mubr.bf16.gmra.mrb[0].mxu0 %v142
  %v195 = vpop.f32.mrb[0].mxu0
  %v196 = vadd.f32 %v88, %v195
  %v197 = vpop.f32.mrb[0].mxu0
  %v198 = vpop.f32.mrb[0].mxu0
  %v199 = vadd.f32 %v88, %v198
  %v200 = vpop.f32.mrb[0].mxu0
  %201 = vmatprep.mubr.bf16.mxu0 0
  %202 = vmatmul.mubr.bf16.gmra.mrb[0].mxu0 %v145
  %v203 = vpop.f32.mrb[0].mxu0
  %v204 = vadd.f32 %v88, %v203
  %v205 = vpop.f32.mrb[0].mxu0
  %v206 = vpop.f32.mrb[0].mxu0
  %v207 = vadd.f32 %v88, %v206
  %v208 = vpop.f32.mrb[0].mxu0
  %209 = vmatprep.mubr.bf16.mxu0 0
  %210 = vmatmul.mubr.bf16.gmra.mrb[0].mxu0 %v148
  %v211 = vpop.f32.mrb[0].mxu0
  %v212 = vadd.f32 %v88, %v211
  %v213 = vpop.f32.mrb[0].mxu0
  %v214 = vpop.f32.mrb[0].mxu0
  %v215 = vadd.f32 %v88, %v214
  %v216 = vpop.f32.mrb[0].mxu0
  %217 = vmatprep.mubr.bf16.mxu0 0
  %218 = vmatmul.mubr.bf16.gmra.mrb[0].mxu0 %v151
  %v219 = vpop.f32.mrb[0].mxu0
  %v220 = vadd.f32 %v88, %v219
  %v221 = vpop.f32.mrb[0].mxu0
  %v222 = vpop.f32.mrb[0].mxu0
  %v223 = vpop.f32.mrb[0].mxu0
  %224 = vdwg.mxu0
  %v225 = vadd.f32 %v188, %v58
  %v226 = vxor.u32 %v225, 2147483648
  %v227 = vmul.f32 %v226, 1.442695
  %v228 = vpow.pop %v227
  %v229 = vadd.f32 %v228, 1.0
  %v230 = vrcp.pop %v229
  %v231 = vmul.f32 1.0, %v230
  %232 = vrot.lane.b32.xlu0 %v58, 64
  %v233 = vpop.permute.xlu0 %232
  %v235 = vmul.f32 %v231, %v233
  %237 = vrot.lane.b32.xlu0 %v235, 64
  %v238 = vpop.permute.xlu0 %237
  %v240 = vadd.f32 %v188, %v238
  %v241 = vtanh.pop %v240
  %v242 = vsub.f32 1.0, %v231
  %244 = vrot.lane.b32.xlu0 %v241, 96
  %v245 = vpop.permute.xlu0 %244
  %v247 = vmul.f32 %v242, %v245
  %v248 = vmul.f32 %v231, 0.0
  %v249 = vadd.f32 %v247, %v248
  %v250 = vpack.c.bf16 %v249, %v249
  %252 = vrot.lane.b32.xlu0 %v250, 96
  %v253 = vpop.permute.xlu0 %252
  %v258 = vunpack.c.l.b16 %v41
  %v259 = vunpack.c.l.b16 %v42
  %v260 = vunpack.c.l.b16 %v43
  %v261 = vunpack.c.l.b16 %v44
  %v262 = vpack.c.b16 %v259, %v258
  %v263 = vpack.c.b16 %v261, %v260
  %vm266 = vcmask 261120
  %v268 = vsel %vm266, %v253, 0
  %270 = vmatprep.subr.bf16.mxu0 0
  %271 = vmatpush1.bf16.msra.mxu0 %v262
  %272 = vmatprep.subr.bf16.mxu0 0
  %273 = vmatpush1.bf16.msra.mxu0 %v263
  %274 = vmatprep.subr.bf16.mxu0 0
  %275 = vmatpush1.bf16.msra.mxu0 0
  %276 = vmatprep.subr.bf16.mxu0 0
  %277 = vmatpush1.bf16.msra.mxu0 0
  %278 = vmatprep.subr.bf16.mxu0 0
  %279 = vmatpush1.bf16.msra.mxu0 0
  %280 = vmatprep.subr.bf16.mxu0 0
  %281 = vmatpush1.bf16.msra.mxu0 0
  %282 = vmatprep.subr.bf16.mxu0 0
  %283 = vmatpush1.bf16.msra.mxu0 0
  %284 = vmatprep.subr.bf16.mxu0 0
  %285 = vmatpush1.bf16.msra.mxu0 0
  %286 = vmatprep.subr.bf16.mxu0 0
  %287 = vmatpush1.bf16.msra.mxu0 0
  %288 = vmatprep.subr.bf16.mxu0 0
  %289 = vmatpush1.bf16.msra.mxu0 0
  %290 = vmatprep.subr.bf16.mxu0 0
  %291 = vmatpush1.bf16.msra.mxu0 0
  %292 = vmatprep.subr.bf16.mxu0 0
  %293 = vmatpush1.bf16.msra.mxu0 0
  %294 = vmatprep.subr.bf16.mxu0 0
  %295 = vmatpush1.bf16.msra.mxu0 0
  %296 = vmatprep.subr.bf16.mxu0 0
  %297 = vmatpush1.bf16.msra.mxu0 0
  %298 = vmatprep.subr.bf16.mxu0 0
  %299 = vmatpush1.bf16.msra.mxu0 0
  %300 = vmatprep.subr.bf16.mxu0 0
  %301 = vmatpush1.bf16.msra.mxu0 0
  %302 = vmatprep.mubr.bf16.mxu0 0
  %303 = vmatmul.mubr.bf16.gmra.mrb[0].mxu0 %v268
  %v304 = vpop.f32.mrb[0].mxu0
  %v305 = vadd.f32 %v58, %v304
  %v306 = vpop.f32.mrb[0].mxu0
  %v307 = vpop.f32.mrb[0].mxu0
  %v308 = vpop.f32.mrb[0].mxu0
  %309 = vdwg.mxu0
  %v310 = vadd.f32 %v191, %v305
  %v311 = vxor.u32 %v310, 2147483648
  %v312 = vmul.f32 %v311, 1.442695
  %v313 = vpow.pop %v312
  %v314 = vadd.f32 %v313, 1.0
  %v315 = vrcp.pop %v314
  %v316 = vmul.f32 1.0, %v315
  %318 = vrot.lane.b32.xlu0 %v305, 64
  %v319 = vpop.permute.xlu0 %318
  %v321 = vmul.f32 %v316, %v319
  %323 = vrot.lane.b32.xlu0 %v321, 64
  %v324 = vpop.permute.xlu0 %323
  %v326 = vadd.f32 %v191, %v324
  %v327 = vtanh.pop %v326
  %v328 = vsub.f32 1.0, %v316
  %330 = vrot.lane.b32.xlu0 %v327, 96
  %v331 = vpop.permute.xlu0 %330
  %v333 = vmul.f32 %v328, %v331
  %v334 = vmul.f32 %v316, %v249
  %v335 = vadd.f32 %v333, %v334
  %v336 = vpack.c.bf16 %v335, %v335
  %338 = vrot.lane.b32.xlu0 %v336, 96
  %v339 = vpop.permute.xlu0 %338
  %v341 = vsel %vm266, %v339, 0
  %343 = vmatprep.subr.bf16.mxu0 0
  %344 = vmatpush1.bf16.msra.mxu0 %v262
  %345 = vmatprep.subr.bf16.mxu0 0
  %346 = vmatpush1.bf16.msra.mxu0 %v263
  %347 = vmatprep.subr.bf16.mxu0 0
  %348 = vmatpush1.bf16.msra.mxu0 0
  %349 = vmatprep.subr.bf16.mxu0 0
  %350 = vmatpush1.bf16.msra.mxu0 0
  %351 = vmatprep.subr.bf16.mxu0 0
  %352 = vmatpush1.bf16.msra.mxu0 0
  %353 = vmatprep.subr.bf16.mxu0 0
  %354 = vmatpush1.bf16.msra.mxu0 0
  %355 = vmatprep.subr.bf16.mxu0 0
  %356 = vmatpush1.bf16.msra.mxu0 0
  %357 = vmatprep.subr.bf16.mxu0 0
  %358 = vmatpush1.bf16.msra.mxu0 0
  %359 = vmatprep.subr.bf16.mxu0 0
  %360 = vmatpush1.bf16.msra.mxu0 0
  %361 = vmatprep.subr.bf16.mxu0 0
  %362 = vmatpush1.bf16.msra.mxu0 0
  %363 = vmatprep.subr.bf16.mxu0 0
  %364 = vmatpush1.bf16.msra.mxu0 0
  %365 = vmatprep.subr.bf16.mxu0 0
  %366 = vmatpush1.bf16.msra.mxu0 0
  %367 = vmatprep.subr.bf16.mxu0 0
  %368 = vmatpush1.bf16.msra.mxu0 0
  %369 = vmatprep.subr.bf16.mxu0 0
  %370 = vmatpush1.bf16.msra.mxu0 0
  %371 = vmatprep.subr.bf16.mxu0 0
  %372 = vmatpush1.bf16.msra.mxu0 0
  %373 = vmatprep.subr.bf16.mxu0 0
  %374 = vmatpush1.bf16.msra.mxu0 0
  %375 = vmatprep.mubr.bf16.mxu0 0
  %376 = vmatmul.mubr.bf16.gmra.mrb[0].mxu0 %v341
  %v377 = vpop.f32.mrb[0].mxu0
  %v378 = vadd.f32 %v58, %v377
  %v379 = vpop.f32.mrb[0].mxu0
  %v380 = vpop.f32.mrb[0].mxu0
  %v381 = vpop.f32.mrb[0].mxu0
  %382 = vdwg.mxu0
  %v383 = vadd.f32 %v196, %v378
  %v384 = vxor.u32 %v383, 2147483648
  %v385 = vmul.f32 %v384, 1.442695
  %v386 = vpow.pop %v385
  %v387 = vadd.f32 %v386, 1.0
  %v388 = vrcp.pop %v387
  %v389 = vmul.f32 1.0, %v388
  %391 = vrot.lane.b32.xlu0 %v378, 64
  %v392 = vpop.permute.xlu0 %391
  %v394 = vmul.f32 %v389, %v392
  %396 = vrot.lane.b32.xlu0 %v394, 64
  %v397 = vpop.permute.xlu0 %396
  %v399 = vadd.f32 %v196, %v397
  %v400 = vtanh.pop %v399
  %v401 = vsub.f32 1.0, %v389
  %403 = vrot.lane.b32.xlu0 %v400, 96
  %v404 = vpop.permute.xlu0 %403
  %v406 = vmul.f32 %v401, %v404
  %v407 = vmul.f32 %v389, %v335
  %v408 = vadd.f32 %v406, %v407
  %v409 = vpack.c.bf16 %v408, %v408
  %411 = vrot.lane.b32.xlu0 %v409, 96
  %v412 = vpop.permute.xlu0 %411
  %v414 = vsel %vm266, %v412, 0
  %416 = vmatprep.subr.bf16.mxu0 0
  %417 = vmatpush1.bf16.msra.mxu0 %v262
  %418 = vmatprep.subr.bf16.mxu0 0
  %419 = vmatpush1.bf16.msra.mxu0 %v263
  %420 = vmatprep.subr.bf16.mxu0 0
  %421 = vmatpush1.bf16.msra.mxu0 0
  %422 = vmatprep.subr.bf16.mxu0 0
  %423 = vmatpush1.bf16.msra.mxu0 0
  %424 = vmatprep.subr.bf16.mxu0 0
  %425 = vmatpush1.bf16.msra.mxu0 0
  %426 = vmatprep.subr.bf16.mxu0 0
  %427 = vmatpush1.bf16.msra.mxu0 0
  %428 = vmatprep.subr.bf16.mxu0 0
  %429 = vmatpush1.bf16.msra.mxu0 0
  %430 = vmatprep.subr.bf16.mxu0 0
  %431 = vmatpush1.bf16.msra.mxu0 0
  %432 = vmatprep.subr.bf16.mxu0 0
  %433 = vmatpush1.bf16.msra.mxu0 0
  %434 = vmatprep.subr.bf16.mxu0 0
  %435 = vmatpush1.bf16.msra.mxu0 0
  %436 = vmatprep.subr.bf16.mxu0 0
  %437 = vmatpush1.bf16.msra.mxu0 0
  %438 = vmatprep.subr.bf16.mxu0 0
  %439 = vmatpush1.bf16.msra.mxu0 0
  %440 = vmatprep.subr.bf16.mxu0 0
  %441 = vmatpush1.bf16.msra.mxu0 0
  %442 = vmatprep.subr.bf16.mxu0 0
  %443 = vmatpush1.bf16.msra.mxu0 0
  %444 = vmatprep.subr.bf16.mxu0 0
  %445 = vmatpush1.bf16.msra.mxu0 0
  %446 = vmatprep.subr.bf16.mxu0 0
  %447 = vmatpush1.bf16.msra.mxu0 0
  %448 = vmatprep.mubr.bf16.mxu0 0
  %449 = vmatmul.mubr.bf16.gmra.mrb[0].mxu0 %v414
  %v450 = vpop.f32.mrb[0].mxu0
  %v451 = vadd.f32 %v58, %v450
  %v452 = vpop.f32.mrb[0].mxu0
  %v453 = vpop.f32.mrb[0].mxu0
  %v454 = vpop.f32.mrb[0].mxu0
  %455 = vdwg.mxu0
  %v456 = vadd.f32 %v199, %v451
  %v457 = vxor.u32 %v456, 2147483648
  %v458 = vmul.f32 %v457, 1.442695
  %v459 = vpow.pop %v458
  %v460 = vadd.f32 %v459, 1.0
  %v461 = vrcp.pop %v460
  %v462 = vmul.f32 1.0, %v461
  %464 = vrot.lane.b32.xlu0 %v451, 64
  %v465 = vpop.permute.xlu0 %464
  %v467 = vmul.f32 %v462, %v465
  %469 = vrot.lane.b32.xlu0 %v467, 64
  %v470 = vpop.permute.xlu0 %469
  %v472 = vadd.f32 %v199, %v470
  %v473 = vtanh.pop %v472
  %v474 = vsub.f32 1.0, %v462
  %476 = vrot.lane.b32.xlu0 %v473, 96
  %v477 = vpop.permute.xlu0 %476
  %v479 = vmul.f32 %v474, %v477
  %v480 = vmul.f32 %v462, %v408
  %v481 = vadd.f32 %v479, %v480
  %v482 = vpack.c.bf16 %v481, %v481
  %484 = vrot.lane.b32.xlu0 %v482, 96
  %v485 = vpop.permute.xlu0 %484
  %v487 = vsel %vm266, %v485, 0
  %489 = vmatprep.subr.bf16.mxu0 0
  %490 = vmatpush1.bf16.msra.mxu0 %v262
  %491 = vmatprep.subr.bf16.mxu0 0
  %492 = vmatpush1.bf16.msra.mxu0 %v263
  %493 = vmatprep.subr.bf16.mxu0 0
  %494 = vmatpush1.bf16.msra.mxu0 0
  %495 = vmatprep.subr.bf16.mxu0 0
  %496 = vmatpush1.bf16.msra.mxu0 0
  %497 = vmatprep.subr.bf16.mxu0 0
  %498 = vmatpush1.bf16.msra.mxu0 0
  %499 = vmatprep.subr.bf16.mxu0 0
  %500 = vmatpush1.bf16.msra.mxu0 0
  %501 = vmatprep.subr.bf16.mxu0 0
  %502 = vmatpush1.bf16.msra.mxu0 0
  %503 = vmatprep.subr.bf16.mxu0 0
  %504 = vmatpush1.bf16.msra.mxu0 0
  %505 = vmatprep.subr.bf16.mxu0 0
  %506 = vmatpush1.bf16.msra.mxu0 0
  %507 = vmatprep.subr.bf16.mxu0 0
  %508 = vmatpush1.bf16.msra.mxu0 0
  %509 = vmatprep.subr.bf16.mxu0 0
  %510 = vmatpush1.bf16.msra.mxu0 0
  %511 = vmatprep.subr.bf16.mxu0 0
  %512 = vmatpush1.bf16.msra.mxu0 0
  %513 = vmatprep.subr.bf16.mxu0 0
  %514 = vmatpush1.bf16.msra.mxu0 0
  %515 = vmatprep.subr.bf16.mxu0 0
  %516 = vmatpush1.bf16.msra.mxu0 0
  %517 = vmatprep.subr.bf16.mxu0 0
  %518 = vmatpush1.bf16.msra.mxu0 0
  %519 = vmatprep.subr.bf16.mxu0 0
  %520 = vmatpush1.bf16.msra.mxu0 0
  %521 = vmatprep.mubr.bf16.mxu0 0
  %522 = vmatmul.mubr.bf16.gmra.mrb[0].mxu0 %v487
  %v523 = vpop.f32.mrb[0].mxu0
  %v524 = vadd.f32 %v58, %v523
  %v525 = vpop.f32.mrb[0].mxu0
  %v526 = vpop.f32.mrb[0].mxu0
  %v527 = vpop.f32.mrb[0].mxu0
  %528 = vdwg.mxu0
  %v529 = vadd.f32 %v204, %v524
  %v530 = vxor.u32 %v529, 2147483648
  %v531 = vmul.f32 %v530, 1.442695
  %v532 = vpow.pop %v531
  %v533 = vadd.f32 %v532, 1.0
  %v534 = vrcp.pop %v533
  %v535 = vmul.f32 1.0, %v534
  %537 = vrot.lane.b32.xlu0 %v524, 64
  %v538 = vpop.permute.xlu0 %537
  %v540 = vmul.f32 %v535, %v538
  %542 = vrot.lane.b32.xlu0 %v540, 64
  %v543 = vpop.permute.xlu0 %542
  %v545 = vadd.f32 %v204, %v543
  %v546 = vtanh.pop %v545
  %v547 = vsub.f32 1.0, %v535
  %549 = vrot.lane.b32.xlu0 %v546, 96
  %v550 = vpop.permute.xlu0 %549
  %v552 = vmul.f32 %v547, %v550
  %v553 = vmul.f32 %v535, %v481
  %v554 = vadd.f32 %v552, %v553
  %v555 = vpack.c.bf16 %v554, %v554
  %557 = vrot.lane.b32.xlu0 %v555, 96
  %v558 = vpop.permute.xlu0 %557
  %v560 = vsel %vm266, %v558, 0
  %562 = vmatprep.subr.bf16.mxu0 0
  %563 = vmatpush1.bf16.msra.mxu0 %v262
  %564 = vmatprep.subr.bf16.mxu0 0
  %565 = vmatpush1.bf16.msra.mxu0 %v263
  %566 = vmatprep.subr.bf16.mxu0 0
  %567 = vmatpush1.bf16.msra.mxu0 0
  %568 = vmatprep.subr.bf16.mxu0 0
  %569 = vmatpush1.bf16.msra.mxu0 0
  %570 = vmatprep.subr.bf16.mxu0 0
  %571 = vmatpush1.bf16.msra.mxu0 0
  %572 = vmatprep.subr.bf16.mxu0 0
  %573 = vmatpush1.bf16.msra.mxu0 0
  %574 = vmatprep.subr.bf16.mxu0 0
  %575 = vmatpush1.bf16.msra.mxu0 0
  %576 = vmatprep.subr.bf16.mxu0 0
  %577 = vmatpush1.bf16.msra.mxu0 0
  %578 = vmatprep.subr.bf16.mxu0 0
  %579 = vmatpush1.bf16.msra.mxu0 0
  %580 = vmatprep.subr.bf16.mxu0 0
  %581 = vmatpush1.bf16.msra.mxu0 0
  %582 = vmatprep.subr.bf16.mxu0 0
  %583 = vmatpush1.bf16.msra.mxu0 0
  %584 = vmatprep.subr.bf16.mxu0 0
  %585 = vmatpush1.bf16.msra.mxu0 0
  %586 = vmatprep.subr.bf16.mxu0 0
  %587 = vmatpush1.bf16.msra.mxu0 0
  %588 = vmatprep.subr.bf16.mxu0 0
  %589 = vmatpush1.bf16.msra.mxu0 0
  %590 = vmatprep.subr.bf16.mxu0 0
  %591 = vmatpush1.bf16.msra.mxu0 0
  %592 = vmatprep.subr.bf16.mxu0 0
  %593 = vmatpush1.bf16.msra.mxu0 0
  %594 = vmatprep.mubr.bf16.mxu0 0
  %595 = vmatmul.mubr.bf16.gmra.mrb[0].mxu0 %v560
  %v596 = vpop.f32.mrb[0].mxu0
  %v597 = vadd.f32 %v58, %v596
  %v598 = vpop.f32.mrb[0].mxu0
  %v599 = vpop.f32.mrb[0].mxu0
  %v600 = vpop.f32.mrb[0].mxu0
  %601 = vdwg.mxu0
  %v602 = vadd.f32 %v207, %v597
  %v603 = vxor.u32 %v602, 2147483648
  %v604 = vmul.f32 %v603, 1.442695
  %v605 = vpow.pop %v604
  %v606 = vadd.f32 %v605, 1.0
  %v607 = vrcp.pop %v606
  %v608 = vmul.f32 1.0, %v607
  %610 = vrot.lane.b32.xlu0 %v597, 64
  %v611 = vpop.permute.xlu0 %610
  %v613 = vmul.f32 %v608, %v611
  %615 = vrot.lane.b32.xlu0 %v613, 64
  %v616 = vpop.permute.xlu0 %615
  %v618 = vadd.f32 %v207, %v616
  %v619 = vtanh.pop %v618
  %v620 = vsub.f32 1.0, %v608
  %622 = vrot.lane.b32.xlu0 %v619, 96
  %v623 = vpop.permute.xlu0 %622
  %v625 = vmul.f32 %v620, %v623
  %v626 = vmul.f32 %v608, %v554
  %v627 = vadd.f32 %v625, %v626
  %v628 = vpack.c.bf16 %v627, %v627
  %630 = vrot.lane.b32.xlu0 %v628, 96
  %v631 = vpop.permute.xlu0 %630
  %v633 = vsel %vm266, %v631, 0
  %635 = vmatprep.subr.bf16.mxu0 0
  %636 = vmatpush1.bf16.msra.mxu0 %v262
  %637 = vmatprep.subr.bf16.mxu0 0
  %638 = vmatpush1.bf16.msra.mxu0 %v263
  %639 = vmatprep.subr.bf16.mxu0 0
  %640 = vmatpush1.bf16.msra.mxu0 0
  %641 = vmatprep.subr.bf16.mxu0 0
  %642 = vmatpush1.bf16.msra.mxu0 0
  %643 = vmatprep.subr.bf16.mxu0 0
  %644 = vmatpush1.bf16.msra.mxu0 0
  %645 = vmatprep.subr.bf16.mxu0 0
  %646 = vmatpush1.bf16.msra.mxu0 0
  %647 = vmatprep.subr.bf16.mxu0 0
  %648 = vmatpush1.bf16.msra.mxu0 0
  %649 = vmatprep.subr.bf16.mxu0 0
  %650 = vmatpush1.bf16.msra.mxu0 0
  %651 = vmatprep.subr.bf16.mxu0 0
  %652 = vmatpush1.bf16.msra.mxu0 0
  %653 = vmatprep.subr.bf16.mxu0 0
  %654 = vmatpush1.bf16.msra.mxu0 0
  %655 = vmatprep.subr.bf16.mxu0 0
  %656 = vmatpush1.bf16.msra.mxu0 0
  %657 = vmatprep.subr.bf16.mxu0 0
  %658 = vmatpush1.bf16.msra.mxu0 0
  %659 = vmatprep.subr.bf16.mxu0 0
  %660 = vmatpush1.bf16.msra.mxu0 0
  %661 = vmatprep.subr.bf16.mxu0 0
  %662 = vmatpush1.bf16.msra.mxu0 0
  %663 = vmatprep.subr.bf16.mxu0 0
  %664 = vmatpush1.bf16.msra.mxu0 0
  %665 = vmatprep.subr.bf16.mxu0 0
  %666 = vmatpush1.bf16.msra.mxu0 0
  %667 = vmatprep.mubr.bf16.mxu0 0
  %668 = vmatmul.mubr.bf16.gmra.mrb[0].mxu0 %v633
  %v669 = vpop.f32.mrb[0].mxu0
  %v670 = vadd.f32 %v58, %v669
  %v671 = vpop.f32.mrb[0].mxu0
  %v672 = vpop.f32.mrb[0].mxu0
  %v673 = vpop.f32.mrb[0].mxu0
  %674 = vdwg.mxu0
  %v675 = vadd.f32 %v212, %v670
  %v676 = vxor.u32 %v675, 2147483648
  %v677 = vmul.f32 %v676, 1.442695
  %v678 = vpow.pop %v677
  %v679 = vadd.f32 %v678, 1.0
  %v680 = vrcp.pop %v679
  %v681 = vmul.f32 1.0, %v680
  %683 = vrot.lane.b32.xlu0 %v670, 64
  %v684 = vpop.permute.xlu0 %683
  %v686 = vmul.f32 %v681, %v684
  %688 = vrot.lane.b32.xlu0 %v686, 64
  %v689 = vpop.permute.xlu0 %688
  %v691 = vadd.f32 %v212, %v689
  %v692 = vtanh.pop %v691
  %v693 = vsub.f32 1.0, %v681
  %695 = vrot.lane.b32.xlu0 %v692, 96
  %v696 = vpop.permute.xlu0 %695
  %v698 = vmul.f32 %v693, %v696
  %v699 = vmul.f32 %v681, %v627
  %v700 = vadd.f32 %v698, %v699
  %v701 = vpack.c.bf16 %v700, %v700
  %703 = vrot.lane.b32.xlu0 %v701, 96
  %v704 = vpop.permute.xlu0 %703
  %v706 = vsel %vm266, %v704, 0
  %708 = vmatprep.subr.bf16.mxu0 0
  %709 = vmatpush1.bf16.msra.mxu0 %v262
  %710 = vmatprep.subr.bf16.mxu0 0
  %711 = vmatpush1.bf16.msra.mxu0 %v263
  %712 = vmatprep.subr.bf16.mxu0 0
  %713 = vmatpush1.bf16.msra.mxu0 0
  %714 = vmatprep.subr.bf16.mxu0 0
  %715 = vmatpush1.bf16.msra.mxu0 0
  %716 = vmatprep.subr.bf16.mxu0 0
  %717 = vmatpush1.bf16.msra.mxu0 0
  %718 = vmatprep.subr.bf16.mxu0 0
  %719 = vmatpush1.bf16.msra.mxu0 0
  %720 = vmatprep.subr.bf16.mxu0 0
  %721 = vmatpush1.bf16.msra.mxu0 0
  %722 = vmatprep.subr.bf16.mxu0 0
  %723 = vmatpush1.bf16.msra.mxu0 0
  %724 = vmatprep.subr.bf16.mxu0 0
  %725 = vmatpush1.bf16.msra.mxu0 0
  %726 = vmatprep.subr.bf16.mxu0 0
  %727 = vmatpush1.bf16.msra.mxu0 0
  %728 = vmatprep.subr.bf16.mxu0 0
  %729 = vmatpush1.bf16.msra.mxu0 0
  %730 = vmatprep.subr.bf16.mxu0 0
  %731 = vmatpush1.bf16.msra.mxu0 0
  %732 = vmatprep.subr.bf16.mxu0 0
  %733 = vmatpush1.bf16.msra.mxu0 0
  %734 = vmatprep.subr.bf16.mxu0 0
  %735 = vmatpush1.bf16.msra.mxu0 0
  %736 = vmatprep.subr.bf16.mxu0 0
  %737 = vmatpush1.bf16.msra.mxu0 0
  %738 = vmatprep.subr.bf16.mxu0 0
  %739 = vmatpush1.bf16.msra.mxu0 0
  %740 = vmatprep.mubr.bf16.mxu0 0
  %741 = vmatmul.mubr.bf16.gmra.mrb[0].mxu0 %v706
  %v742 = vpop.f32.mrb[0].mxu0
  %v743 = vadd.f32 %v58, %v742
  %v744 = vpop.f32.mrb[0].mxu0
  %v745 = vpop.f32.mrb[0].mxu0
  %v746 = vpop.f32.mrb[0].mxu0
  %747 = vdwg.mxu0
  %v748 = vadd.f32 %v215, %v743
  %v749 = vxor.u32 %v748, 2147483648
  %v750 = vmul.f32 %v749, 1.442695
  %v751 = vpow.pop %v750
  %v752 = vadd.f32 %v751, 1.0
  %v753 = vrcp.pop %v752
  %v754 = vmul.f32 1.0, %v753
  %756 = vrot.lane.b32.xlu0 %v743, 64
  %v757 = vpop.permute.xlu0 %756
  %v759 = vmul.f32 %v754, %v757
  %761 = vrot.lane.b32.xlu0 %v759, 64
  %v762 = vpop.permute.xlu0 %761
  %v764 = vadd.f32 %v215, %v762
  %v765 = vtanh.pop %v764
  %v766 = vsub.f32 1.0, %v754
  %768 = vrot.lane.b32.xlu0 %v765, 96
  %v769 = vpop.permute.xlu0 %768
  %v771 = vmul.f32 %v766, %v769
  %v772 = vmul.f32 %v754, %v700
  %v773 = vadd.f32 %v771, %v772
  %v774 = vpack.c.bf16 %v773, %v773
  %776 = vrot.lane.b32.xlu0 %v774, 96
  %v777 = vpop.permute.xlu0 %776
  %v779 = vsel %vm266, %v777, 0
  %781 = vmatprep.subr.bf16.mxu0 0
  %782 = vmatpush1.bf16.msra.mxu0 %v262
  %783 = vmatprep.subr.bf16.mxu0 0
  %784 = vmatpush1.bf16.msra.mxu0 %v263
  %785 = vmatprep.subr.bf16.mxu0 0
  %786 = vmatpush1.bf16.msra.mxu0 0
  %787 = vmatprep.subr.bf16.mxu0 0
  %788 = vmatpush1.bf16.msra.mxu0 0
  %789 = vmatprep.subr.bf16.mxu0 0
  %790 = vmatpush1.bf16.msra.mxu0 0
  %791 = vmatprep.subr.bf16.mxu0 0
  %792 = vmatpush1.bf16.msra.mxu0 0
  %793 = vmatprep.subr.bf16.mxu0 0
  %794 = vmatpush1.bf16.msra.mxu0 0
  %795 = vmatprep.subr.bf16.mxu0 0
  %796 = vmatpush1.bf16.msra.mxu0 0
  %797 = vmatprep.subr.bf16.mxu0 0
  %798 = vmatpush1.bf16.msra.mxu0 0
  %799 = vmatprep.subr.bf16.mxu0 0
  %800 = vmatpush1.bf16.msra.mxu0 0
  %801 = vmatprep.subr.bf16.mxu0 0
  %802 = vmatpush1.bf16.msra.mxu0 0
  %803 = vmatprep.subr.bf16.mxu0 0
  %804 = vmatpush1.bf16.msra.mxu0 0
  %805 = vmatprep.subr.bf16.mxu0 0
  %806 = vmatpush1.bf16.msra.mxu0 0
  %807 = vmatprep.subr.bf16.mxu0 0
  %808 = vmatpush1.bf16.msra.mxu0 0
  %809 = vmatprep.subr.bf16.mxu0 0
  %810 = vmatpush1.bf16.msra.mxu0 0
  %811 = vmatprep.subr.bf16.mxu0 0
  %812 = vmatpush1.bf16.msra.mxu0 0
  %813 = vmatprep.mubr.bf16.mxu0 0
  %814 = vmatmul.mubr.bf16.gmra.mrb[0].mxu0 %v779
  %v815 = vpop.f32.mrb[0].mxu0
  %v816 = vadd.f32 %v58, %v815
  %v817 = vpop.f32.mrb[0].mxu0
  %v818 = vpop.f32.mrb[0].mxu0
  %v819 = vpop.f32.mrb[0].mxu0
  %820 = vdwg.mxu0
  %v821 = vadd.f32 %v220, %v816
  %v822 = vxor.u32 %v821, 2147483648
  %v823 = vmul.f32 %v822, 1.442695
  %v824 = vpow.pop %v823
  %v825 = vadd.f32 %v824, 1.0
  %v826 = vrcp.pop %v825
  %v827 = vmul.f32 1.0, %v826
  %829 = vrot.lane.b32.xlu0 %v816, 64
  %v830 = vpop.permute.xlu0 %829
  %v832 = vmul.f32 %v827, %v830
  %834 = vrot.lane.b32.xlu0 %v832, 64
  %v835 = vpop.permute.xlu0 %834
  %v837 = vadd.f32 %v220, %v835
  %v838 = vtanh.pop %v837
  %v839 = vsub.f32 1.0, %v827
  %841 = vrot.lane.b32.xlu0 %v838, 96
  %v842 = vpop.permute.xlu0 %841
  %v844 = vmul.f32 %v839, %v842
  %v845 = vmul.f32 %v827, %v773
  %v846 = vadd.f32 %v844, %v845
  %v847 = vpack.c.bf16 %v846, %v846
  %849 = vrot.lane.b32.xlu0 %v847, 96
  %v850 = vpop.permute.xlu0 %849
  %v855 = vunpack.c.l.b16 %v49
  %v856 = vunpack.c.l.b16 %v50
  %v857 = vunpack.c.l.b16 %v51
  %v858 = vunpack.c.l.b16 %v52
  %v859 = vpack.c.b16 %v856, %v855
  %v860 = vpack.c.b16 %v858, %v857
  %v864 = vsel %vm266, %v850, 0
  %866 = vmatprep.subr.bf16.mxu0 0
  %867 = vmatpush1.bf16.msra.mxu0 %v859
  %868 = vmatprep.subr.bf16.mxu0 0
  %869 = vmatpush1.bf16.msra.mxu0 %v860
  %870 = vmatprep.subr.bf16.mxu0 0
  %871 = vmatpush1.bf16.msra.mxu0 0
  %872 = vmatprep.subr.bf16.mxu0 0
  %873 = vmatpush1.bf16.msra.mxu0 0
  %874 = vmatprep.subr.bf16.mxu0 0
  %875 = vmatpush1.bf16.msra.mxu0 0
  %876 = vmatprep.subr.bf16.mxu0 0
  %877 = vmatpush1.bf16.msra.mxu0 0
  %878 = vmatprep.subr.bf16.mxu0 0
  %879 = vmatpush1.bf16.msra.mxu0 0
  %880 = vmatprep.subr.bf16.mxu0 0
  %881 = vmatpush1.bf16.msra.mxu0 0
  %882 = vmatprep.subr.bf16.mxu0 0
  %883 = vmatpush1.bf16.msra.mxu0 0
  %884 = vmatprep.subr.bf16.mxu0 0
  %885 = vmatpush1.bf16.msra.mxu0 0
  %886 = vmatprep.subr.bf16.mxu0 0
  %887 = vmatpush1.bf16.msra.mxu0 0
  %888 = vmatprep.subr.bf16.mxu0 0
  %889 = vmatpush1.bf16.msra.mxu0 0
  %890 = vmatprep.subr.bf16.mxu0 0
  %891 = vmatpush1.bf16.msra.mxu0 0
  %892 = vmatprep.subr.bf16.mxu0 0
  %893 = vmatpush1.bf16.msra.mxu0 0
  %894 = vmatprep.subr.bf16.mxu0 0
  %895 = vmatpush1.bf16.msra.mxu0 0
  %896 = vmatprep.subr.bf16.mxu0 0
  %897 = vmatpush1.bf16.msra.mxu0 0
  %898 = vmatprep.mubr.bf16.mxu0 0
  %899 = vmatmul.mubr.bf16.gmra.mrb[0].mxu0 %v864
  %v900 = vpop.f32.mrb[0].mxu0
  %v901 = vadd.f32 %v72, %v900
  %v902 = vpop.f32.mrb[0].mxu0
  %v903 = vpop.f32.mrb[0].mxu0
  %v904 = vpop.f32.mrb[0].mxu0
  %905 = vdwg.mxu0
  %v910 = vunpack.c.l.b16 %v45
  %v911 = vunpack.c.h.b16 %v45
  %v912 = vunpack.c.l.b16 %v46
  %v913 = vunpack.c.h.b16 %v46
  %v914 = vunpack.c.l.b16 %v47
  %v915 = vunpack.c.h.b16 %v47
  %v916 = vunpack.c.l.b16 %v48
  %v917 = vunpack.c.h.b16 %v48
  %v918 = vpack.c.b16 %v912, %v910
  %v919 = vpack.c.b16 %v913, %v911
  %v920 = vpack.c.b16 %v916, %v914
  %v921 = vpack.c.b16 %v917, %v915
  %926 = vmatprep.subr.bf16.mxu0 %v919
  %927 = vmatpush1.bf16.msra.mxu0 %v918
  %928 = vmatprep.subr.bf16.mxu0 %v921
  %929 = vmatpush1.bf16.msra.mxu0 %v920
  %930 = vmatprep.subr.bf16.mxu0 0
  %931 = vmatpush1.bf16.msra.mxu0 0
  %932 = vmatprep.subr.bf16.mxu0 0
  %933 = vmatpush1.bf16.msra.mxu0 0
  %934 = vmatprep.subr.bf16.mxu0 0
  %935 = vmatpush1.bf16.msra.mxu0 0
  %936 = vmatprep.subr.bf16.mxu0 0
  %937 = vmatpush1.bf16.msra.mxu0 0
  %938 = vmatprep.subr.bf16.mxu0 0
  %939 = vmatpush1.bf16.msra.mxu0 0
  %940 = vmatprep.subr.bf16.mxu0 0
  %941 = vmatpush1.bf16.msra.mxu0 0
  %942 = vmatprep.subr.bf16.mxu0 0
  %943 = vmatpush1.bf16.msra.mxu0 0
  %944 = vmatprep.subr.bf16.mxu0 0
  %945 = vmatpush1.bf16.msra.mxu0 0
  %946 = vmatprep.subr.bf16.mxu0 0
  %947 = vmatpush1.bf16.msra.mxu0 0
  %948 = vmatprep.subr.bf16.mxu0 0
  %949 = vmatpush1.bf16.msra.mxu0 0
  %950 = vmatprep.subr.bf16.mxu0 0
  %951 = vmatpush1.bf16.msra.mxu0 0
  %952 = vmatprep.subr.bf16.mxu0 0
  %953 = vmatpush1.bf16.msra.mxu0 0
  %954 = vmatprep.subr.bf16.mxu0 0
  %955 = vmatpush1.bf16.msra.mxu0 0
  %956 = vmatprep.subr.bf16.mxu0 0
  %957 = vmatpush1.bf16.msra.mxu0 0
  %958 = vmatprep.mubr.bf16.mxu0 0
  %959 = vmatmul.mubr.bf16.gmra.mrb[0].mxu0 %v864
  %v960 = vpop.f32.mrb[0].mxu0
  %v961 = vadd.f32 0.0, %v960
  %v962 = vpop.f32.mrb[0].mxu0
  %v963 = vadd.f32 0.0, %v962
  %v964 = vpop.f32.mrb[0].mxu0
  %v965 = vpop.f32.mrb[0].mxu0
  %966 = vdwg.mxu0
  %v967 = vadd.f32 %v961, %v65
  %v968 = vadd.f32 %v963, %v58
  %v969 = vadd.f32 %v967, %v968
  %v970 = vxor.u32 %v969, 2147483648
  %v971 = vmul.f32 %v970, 1.442695
  %v972 = vpow.pop %v971
  %v973 = vadd.f32 %v972, 1.0
  %v974 = vrcp.pop %v973
  %v975 = vmul.f32 1.0, %v974
  %977 = vrot.lane.b32.xlu0 %v968, 64
  %v978 = vpop.permute.xlu0 %977
  %v980 = vmul.f32 %v975, %v978
  %982 = vrot.lane.b32.xlu0 %v980, 64
  %v983 = vpop.permute.xlu0 %982
  %v985 = vadd.f32 %v967, %v983
  %v986 = vtanh.pop %v985
  %v987 = vsub.f32 1.0, %v975
  %989 = vrot.lane.b32.xlu0 %v986, 96
  %v990 = vpop.permute.xlu0 %989
  %v992 = vmul.f32 %v987, %v990
  %v993 = vmul.f32 %v975, %v846
  %v994 = vadd.f32 %v992, %v993
  %v995 = vpack.c.bf16 %v994, %v994
  %997 = vrot.lane.b32.xlu0 %v995, 96
  %v998 = vpop.permute.xlu0 %997
  %v1000 = vsel %vm266, %v998, 0
  %1002 = vmatprep.subr.bf16.mxu0 0
  %1003 = vmatpush1.bf16.msra.mxu0 %v859
  %1004 = vmatprep.subr.bf16.mxu0 0
  %1005 = vmatpush1.bf16.msra.mxu0 %v860
  %1006 = vmatprep.subr.bf16.mxu0 0
  %1007 = vmatpush1.bf16.msra.mxu0 0
  %1008 = vmatprep.subr.bf16.mxu0 0
  %1009 = vmatpush1.bf16.msra.mxu0 0
  %1010 = vmatprep.subr.bf16.mxu0 0
  %1011 = vmatpush1.bf16.msra.mxu0 0
  %1012 = vmatprep.subr.bf16.mxu0 0
  %1013 = vmatpush1.bf16.msra.mxu0 0
  %1014 = vmatprep.subr.bf16.mxu0 0
  %1015 = vmatpush1.bf16.msra.mxu0 0
  %1016 = vmatprep.subr.bf16.mxu0 0
  %1017 = vmatpush1.bf16.msra.mxu0 0
  %1018 = vmatprep.subr.bf16.mxu0 0
  %1019 = vmatpush1.bf16.msra.mxu0 0
  %1020 = vmatprep.subr.bf16.mxu0 0
  %1021 = vmatpush1.bf16.msra.mxu0 0
  %1022 = vmatprep.subr.bf16.mxu0 0
  %1023 = vmatpush1.bf16.msra.mxu0 0
  %1024 = vmatprep.subr.bf16.mxu0 0
  %1025 = vmatpush1.bf16.msra.mxu0 0
  %1026 = vmatprep.subr.bf16.mxu0 0
  %1027 = vmatpush1.bf16.msra.mxu0 0
  %1028 = vmatprep.subr.bf16.mxu0 0
  %1029 = vmatpush1.bf16.msra.mxu0 0
  %1030 = vmatprep.subr.bf16.mxu0 0
  %1031 = vmatpush1.bf16.msra.mxu0 0
  %1032 = vmatprep.subr.bf16.mxu0 0
  %1033 = vmatpush1.bf16.msra.mxu0 0
  %1034 = vmatprep.mubr.bf16.mxu0 0
  %1035 = vmatmul.mubr.bf16.gmra.mrb[0].mxu0 %v1000
  %v1036 = vpop.f32.mrb[0].mxu0
  %v1037 = vadd.f32 %v72, %v1036
  %v1038 = vpop.f32.mrb[0].mxu0
  %v1039 = vpop.f32.mrb[0].mxu0
  %v1040 = vpop.f32.mrb[0].mxu0
  %1041 = vdwg.mxu0
  %1042 = vmatprep.subr.bf16.mxu0 %v919
  %1043 = vmatpush1.bf16.msra.mxu0 %v918
  %1044 = vmatprep.subr.bf16.mxu0 %v921
  %1045 = vmatpush1.bf16.msra.mxu0 %v920
  %1046 = vmatprep.subr.bf16.mxu0 0
  %1047 = vmatpush1.bf16.msra.mxu0 0
  %1048 = vmatprep.subr.bf16.mxu0 0
  %1049 = vmatpush1.bf16.msra.mxu0 0
  %1050 = vmatprep.subr.bf16.mxu0 0
  %1051 = vmatpush1.bf16.msra.mxu0 0
  %1052 = vmatprep.subr.bf16.mxu0 0
  %1053 = vmatpush1.bf16.msra.mxu0 0
  %1054 = vmatprep.subr.bf16.mxu0 0
  %1055 = vmatpush1.bf16.msra.mxu0 0
  %1056 = vmatprep.subr.bf16.mxu0 0
  %1057 = vmatpush1.bf16.msra.mxu0 0
  %1058 = vmatprep.subr.bf16.mxu0 0
  %1059 = vmatpush1.bf16.msra.mxu0 0
  %1060 = vmatprep.subr.bf16.mxu0 0
  %1061 = vmatpush1.bf16.msra.mxu0 0
  %1062 = vmatprep.subr.bf16.mxu0 0
  %1063 = vmatpush1.bf16.msra.mxu0 0
  %1064 = vmatprep.subr.bf16.mxu0 0
  %1065 = vmatpush1.bf16.msra.mxu0 0
  %1066 = vmatprep.subr.bf16.mxu0 0
  %1067 = vmatpush1.bf16.msra.mxu0 0
  %1068 = vmatprep.subr.bf16.mxu0 0
  %1069 = vmatpush1.bf16.msra.mxu0 0
  %1070 = vmatprep.subr.bf16.mxu0 0
  %1071 = vmatpush1.bf16.msra.mxu0 0
  %1072 = vmatprep.subr.bf16.mxu0 0
  %1073 = vmatpush1.bf16.msra.mxu0 0
  %1074 = vmatprep.mubr.bf16.mxu0 0
  %1075 = vmatmul.mubr.bf16.gmra.mrb[0].mxu0 %v1000
  %v1076 = vpop.f32.mrb[0].mxu0
  %v1077 = vadd.f32 0.0, %v1076
  %v1078 = vpop.f32.mrb[0].mxu0
  %v1079 = vadd.f32 0.0, %v1078
  %v1080 = vpop.f32.mrb[0].mxu0
  %v1081 = vpop.f32.mrb[0].mxu0
  %1082 = vdwg.mxu0
  %v1083 = vadd.f32 %v1077, %v65
  %v1084 = vadd.f32 %v1079, %v58
  %v1085 = vadd.f32 %v1083, %v1084
  %v1086 = vxor.u32 %v1085, 2147483648
  %v1087 = vmul.f32 %v1086, 1.442695
  %v1088 = vpow.pop %v1087
  %v1089 = vadd.f32 %v1088, 1.0
  %v1090 = vrcp.pop %v1089
  %v1091 = vmul.f32 1.0, %v1090
  %1093 = vrot.lane.b32.xlu0 %v1084, 64
  %v1094 = vpop.permute.xlu0 %1093
  %v1096 = vmul.f32 %v1091, %v1094
  %1098 = vrot.lane.b32.xlu0 %v1096, 64
  %v1099 = vpop.permute.xlu0 %1098
  %v1101 = vadd.f32 %v1083, %v1099
  %v1102 = vtanh.pop %v1101
  %v1103 = vsub.f32 1.0, %v1091
  %1105 = vrot.lane.b32.xlu0 %v1102, 96
  %v1106 = vpop.permute.xlu0 %1105
  %v1108 = vmul.f32 %v1103, %v1106
  %v1109 = vmul.f32 %v1091, %v994
  %v1110 = vadd.f32 %v1108, %v1109
  %v1111 = vpack.c.bf16 %v1110, %v1110
  %1113 = vrot.lane.b32.xlu0 %v1111, 96
  %v1114 = vpop.permute.xlu0 %1113
  %v1116 = vsel %vm266, %v1114, 0
  %1118 = vmatprep.subr.bf16.mxu0 0
  %1119 = vmatpush1.bf16.msra.mxu0 %v859
  %1120 = vmatprep.subr.bf16.mxu0 0
  %1121 = vmatpush1.bf16.msra.mxu0 %v860
  %1122 = vmatprep.subr.bf16.mxu0 0
  %1123 = vmatpush1.bf16.msra.mxu0 0
  %1124 = vmatprep.subr.bf16.mxu0 0
  %1125 = vmatpush1.bf16.msra.mxu0 0
  %1126 = vmatprep.subr.bf16.mxu0 0
  %1127 = vmatpush1.bf16.msra.mxu0 0
  %1128 = vmatprep.subr.bf16.mxu0 0
  %1129 = vmatpush1.bf16.msra.mxu0 0
  %1130 = vmatprep.subr.bf16.mxu0 0
  %1131 = vmatpush1.bf16.msra.mxu0 0
  %1132 = vmatprep.subr.bf16.mxu0 0
  %1133 = vmatpush1.bf16.msra.mxu0 0
  %1134 = vmatprep.subr.bf16.mxu0 0
  %1135 = vmatpush1.bf16.msra.mxu0 0
  %1136 = vmatprep.subr.bf16.mxu0 0
  %1137 = vmatpush1.bf16.msra.mxu0 0
  %1138 = vmatprep.subr.bf16.mxu0 0
  %1139 = vmatpush1.bf16.msra.mxu0 0
  %1140 = vmatprep.subr.bf16.mxu0 0
  %1141 = vmatpush1.bf16.msra.mxu0 0
  %1142 = vmatprep.subr.bf16.mxu0 0
  %1143 = vmatpush1.bf16.msra.mxu0 0
  %1144 = vmatprep.subr.bf16.mxu0 0
  %1145 = vmatpush1.bf16.msra.mxu0 0
  %1146 = vmatprep.subr.bf16.mxu0 0
  %1147 = vmatpush1.bf16.msra.mxu0 0
  %1148 = vmatprep.subr.bf16.mxu0 0
  %1149 = vmatpush1.bf16.msra.mxu0 0
  %1150 = vmatprep.mubr.bf16.mxu0 0
  %1151 = vmatmul.mubr.bf16.gmra.mrb[0].mxu0 %v1116
  %v1152 = vpop.f32.mrb[0].mxu0
  %v1153 = vadd.f32 %v72, %v1152
  %v1154 = vpop.f32.mrb[0].mxu0
  %v1155 = vpop.f32.mrb[0].mxu0
  %v1156 = vpop.f32.mrb[0].mxu0
  %1157 = vdwg.mxu0
  %1158 = vmatprep.subr.bf16.mxu0 %v919
  %1159 = vmatpush1.bf16.msra.mxu0 %v918
  %1160 = vmatprep.subr.bf16.mxu0 %v921
  %1161 = vmatpush1.bf16.msra.mxu0 %v920
  %1162 = vmatprep.subr.bf16.mxu0 0
  %1163 = vmatpush1.bf16.msra.mxu0 0
  %1164 = vmatprep.subr.bf16.mxu0 0
  %1165 = vmatpush1.bf16.msra.mxu0 0
  %1166 = vmatprep.subr.bf16.mxu0 0
  %1167 = vmatpush1.bf16.msra.mxu0 0
  %1168 = vmatprep.subr.bf16.mxu0 0
  %1169 = vmatpush1.bf16.msra.mxu0 0
  %1170 = vmatprep.subr.bf16.mxu0 0
  %1171 = vmatpush1.bf16.msra.mxu0 0
  %1172 = vmatprep.subr.bf16.mxu0 0
  %1173 = vmatpush1.bf16.msra.mxu0 0
  %1174 = vmatprep.subr.bf16.mxu0 0
  %1175 = vmatpush1.bf16.msra.mxu0 0
  %1176 = vmatprep.subr.bf16.mxu0 0
  %1177 = vmatpush1.bf16.msra.mxu0 0
  %1178 = vmatprep.subr.bf16.mxu0 0
  %1179 = vmatpush1.bf16.msra.mxu0 0
  %1180 = vmatprep.subr.bf16.mxu0 0
  %1181 = vmatpush1.bf16.msra.mxu0 0
  %1182 = vmatprep.subr.bf16.mxu0 0
  %1183 = vmatpush1.bf16.msra.mxu0 0
  %1184 = vmatprep.subr.bf16.mxu0 0
  %1185 = vmatpush1.bf16.msra.mxu0 0
  %1186 = vmatprep.subr.bf16.mxu0 0
  %1187 = vmatpush1.bf16.msra.mxu0 0
  %1188 = vmatprep.subr.bf16.mxu0 0
  %1189 = vmatpush1.bf16.msra.mxu0 0
  %1190 = vmatprep.mubr.bf16.mxu0 0
  %1191 = vmatmul.mubr.bf16.gmra.mrb[0].mxu0 %v1116
  %v1192 = vpop.f32.mrb[0].mxu0
  %v1193 = vadd.f32 0.0, %v1192
  %v1194 = vpop.f32.mrb[0].mxu0
  %v1195 = vadd.f32 0.0, %v1194
  %v1196 = vpop.f32.mrb[0].mxu0
  %v1197 = vpop.f32.mrb[0].mxu0
  %1198 = vdwg.mxu0
  %v1199 = vadd.f32 %v1193, %v65
  %v1200 = vadd.f32 %v1195, %v58
  %v1201 = vadd.f32 %v1199, %v1200
  %v1202 = vxor.u32 %v1201, 2147483648
  %v1203 = vmul.f32 %v1202, 1.442695
  %v1204 = vpow.pop %v1203
  %v1205 = vadd.f32 %v1204, 1.0
  %v1206 = vrcp.pop %v1205
  %v1207 = vmul.f32 1.0, %v1206
  %1209 = vrot.lane.b32.xlu0 %v1200, 64
  %v1210 = vpop.permute.xlu0 %1209
  %v1212 = vmul.f32 %v1207, %v1210
  %1214 = vrot.lane.b32.xlu0 %v1212, 64
  %v1215 = vpop.permute.xlu0 %1214
  %v1217 = vadd.f32 %v1199, %v1215
  %v1218 = vtanh.pop %v1217
  %v1219 = vsub.f32 1.0, %v1207
  %1221 = vrot.lane.b32.xlu0 %v1218, 96
  %v1222 = vpop.permute.xlu0 %1221
  %v1224 = vmul.f32 %v1219, %v1222
  %v1225 = vmul.f32 %v1207, %v1110
  %v1226 = vadd.f32 %v1224, %v1225
  %v1227 = vpack.c.bf16 %v1226, %v1226
  %1229 = vrot.lane.b32.xlu0 %v1227, 96
  %v1230 = vpop.permute.xlu0 %1229
  %v1232 = vsel %vm266, %v1230, 0
  %1234 = vmatprep.subr.bf16.mxu0 0
  %1235 = vmatpush1.bf16.msra.mxu0 %v859
  %1236 = vmatprep.subr.bf16.mxu0 0
  %1237 = vmatpush1.bf16.msra.mxu0 %v860
  %1238 = vmatprep.subr.bf16.mxu0 0
  %1239 = vmatpush1.bf16.msra.mxu0 0
  %1240 = vmatprep.subr.bf16.mxu0 0
  %1241 = vmatpush1.bf16.msra.mxu0 0
  %1242 = vmatprep.subr.bf16.mxu0 0
  %1243 = vmatpush1.bf16.msra.mxu0 0
  %1244 = vmatprep.subr.bf16.mxu0 0
  %1245 = vmatpush1.bf16.msra.mxu0 0
  %1246 = vmatprep.subr.bf16.mxu0 0
  %1247 = vmatpush1.bf16.msra.mxu0 0
  %1248 = vmatprep.subr.bf16.mxu0 0
  %1249 = vmatpush1.bf16.msra.mxu0 0
  %1250 = vmatprep.subr.bf16.mxu0 0
  %1251 = vmatpush1.bf16.msra.mxu0 0
  %1252 = vmatprep.subr.bf16.mxu0 0
  %1253 = vmatpush1.bf16.msra.mxu0 0
  %1254 = vmatprep.subr.bf16.mxu0 0
  %1255 = vmatpush1.bf16.msra.mxu0 0
  %1256 = vmatprep.subr.bf16.mxu0 0
  %1257 = vmatpush1.bf16.msra.mxu0 0
  %1258 = vmatprep.subr.bf16.mxu0 0
  %1259 = vmatpush1.bf16.msra.mxu0 0
  %1260 = vmatprep.subr.bf16.mxu0 0
  %1261 = vmatpush1.bf16.msra.mxu0 0
  %1262 = vmatprep.subr.bf16.mxu0 0
  %1263 = vmatpush1.bf16.msra.mxu0 0
  %1264 = vmatprep.subr.bf16.mxu0 0
  %1265 = vmatpush1.bf16.msra.mxu0 0
  %1266 = vmatprep.mubr.bf16.mxu0 0
  %1267 = vmatmul.mubr.bf16.gmra.mrb[0].mxu0 %v1232
  %v1268 = vpop.f32.mrb[0].mxu0
  %v1269 = vadd.f32 %v72, %v1268
  %v1270 = vpop.f32.mrb[0].mxu0
  %v1271 = vpop.f32.mrb[0].mxu0
  %v1272 = vpop.f32.mrb[0].mxu0
  %1273 = vdwg.mxu0
  %1274 = vmatprep.subr.bf16.mxu0 %v919
  %1275 = vmatpush1.bf16.msra.mxu0 %v918
  %1276 = vmatprep.subr.bf16.mxu0 %v921
  %1277 = vmatpush1.bf16.msra.mxu0 %v920
  %1278 = vmatprep.subr.bf16.mxu0 0
  %1279 = vmatpush1.bf16.msra.mxu0 0
  %1280 = vmatprep.subr.bf16.mxu0 0
  %1281 = vmatpush1.bf16.msra.mxu0 0
  %1282 = vmatprep.subr.bf16.mxu0 0
  %1283 = vmatpush1.bf16.msra.mxu0 0
  %1284 = vmatprep.subr.bf16.mxu0 0
  %1285 = vmatpush1.bf16.msra.mxu0 0
  %1286 = vmatprep.subr.bf16.mxu0 0
  %1287 = vmatpush1.bf16.msra.mxu0 0
  %1288 = vmatprep.subr.bf16.mxu0 0
  %1289 = vmatpush1.bf16.msra.mxu0 0
  %1290 = vmatprep.subr.bf16.mxu0 0
  %1291 = vmatpush1.bf16.msra.mxu0 0
  %1292 = vmatprep.subr.bf16.mxu0 0
  %1293 = vmatpush1.bf16.msra.mxu0 0
  %1294 = vmatprep.subr.bf16.mxu0 0
  %1295 = vmatpush1.bf16.msra.mxu0 0
  %1296 = vmatprep.subr.bf16.mxu0 0
  %1297 = vmatpush1.bf16.msra.mxu0 0
  %1298 = vmatprep.subr.bf16.mxu0 0
  %1299 = vmatpush1.bf16.msra.mxu0 0
  %1300 = vmatprep.subr.bf16.mxu0 0
  %1301 = vmatpush1.bf16.msra.mxu0 0
  %1302 = vmatprep.subr.bf16.mxu0 0
  %1303 = vmatpush1.bf16.msra.mxu0 0
  %1304 = vmatprep.subr.bf16.mxu0 0
  %1305 = vmatpush1.bf16.msra.mxu0 0
  %1306 = vmatprep.mubr.bf16.mxu0 0
  %1307 = vmatmul.mubr.bf16.gmra.mrb[0].mxu0 %v1232
  %v1308 = vpop.f32.mrb[0].mxu0
  %v1309 = vadd.f32 0.0, %v1308
  %v1310 = vpop.f32.mrb[0].mxu0
  %v1311 = vadd.f32 0.0, %v1310
  %v1312 = vpop.f32.mrb[0].mxu0
  %v1313 = vpop.f32.mrb[0].mxu0
  %1314 = vdwg.mxu0
  %v1315 = vadd.f32 %v1309, %v65
  %v1316 = vadd.f32 %v1311, %v58
  %v1317 = vadd.f32 %v1315, %v1316
  %v1318 = vxor.u32 %v1317, 2147483648
  %v1319 = vmul.f32 %v1318, 1.442695
  %v1320 = vpow.pop %v1319
  %v1321 = vadd.f32 %v1320, 1.0
  %v1322 = vrcp.pop %v1321
  %v1323 = vmul.f32 1.0, %v1322
  %1325 = vrot.lane.b32.xlu0 %v1316, 64
  %v1326 = vpop.permute.xlu0 %1325
  %v1328 = vmul.f32 %v1323, %v1326
  %1330 = vrot.lane.b32.xlu0 %v1328, 64
  %v1331 = vpop.permute.xlu0 %1330
  %v1333 = vadd.f32 %v1315, %v1331
  %v1334 = vtanh.pop %v1333
  %v1335 = vsub.f32 1.0, %v1323
  %1337 = vrot.lane.b32.xlu0 %v1334, 96
  %v1338 = vpop.permute.xlu0 %1337
  %v1340 = vmul.f32 %v1335, %v1338
  %v1341 = vmul.f32 %v1323, %v1226
  %v1342 = vadd.f32 %v1340, %v1341
  %v1343 = vpack.c.bf16 %v1342, %v1342
  %1345 = vrot.lane.b32.xlu0 %v1343, 96
  %v1346 = vpop.permute.xlu0 %1345
  %v1348 = vsel %vm266, %v1346, 0
  %1350 = vmatprep.subr.bf16.mxu0 0
  %1351 = vmatpush1.bf16.msra.mxu0 %v859
  %1352 = vmatprep.subr.bf16.mxu0 0
  %1353 = vmatpush1.bf16.msra.mxu0 %v860
  %1354 = vmatprep.subr.bf16.mxu0 0
  %1355 = vmatpush1.bf16.msra.mxu0 0
  %1356 = vmatprep.subr.bf16.mxu0 0
  %1357 = vmatpush1.bf16.msra.mxu0 0
  %1358 = vmatprep.subr.bf16.mxu0 0
  %1359 = vmatpush1.bf16.msra.mxu0 0
  %1360 = vmatprep.subr.bf16.mxu0 0
  %1361 = vmatpush1.bf16.msra.mxu0 0
  %1362 = vmatprep.subr.bf16.mxu0 0
  %1363 = vmatpush1.bf16.msra.mxu0 0
  %1364 = vmatprep.subr.bf16.mxu0 0
  %1365 = vmatpush1.bf16.msra.mxu0 0
  %1366 = vmatprep.subr.bf16.mxu0 0
  %1367 = vmatpush1.bf16.msra.mxu0 0
  %1368 = vmatprep.subr.bf16.mxu0 0
  %1369 = vmatpush1.bf16.msra.mxu0 0
  %1370 = vmatprep.subr.bf16.mxu0 0
  %1371 = vmatpush1.bf16.msra.mxu0 0
  %1372 = vmatprep.subr.bf16.mxu0 0
  %1373 = vmatpush1.bf16.msra.mxu0 0
  %1374 = vmatprep.subr.bf16.mxu0 0
  %1375 = vmatpush1.bf16.msra.mxu0 0
  %1376 = vmatprep.subr.bf16.mxu0 0
  %1377 = vmatpush1.bf16.msra.mxu0 0
  %1378 = vmatprep.subr.bf16.mxu0 0
  %1379 = vmatpush1.bf16.msra.mxu0 0
  %1380 = vmatprep.subr.bf16.mxu0 0
  %1381 = vmatpush1.bf16.msra.mxu0 0
  %1382 = vmatprep.mubr.bf16.mxu0 0
  %1383 = vmatmul.mubr.bf16.gmra.mrb[0].mxu0 %v1348
  %v1384 = vpop.f32.mrb[0].mxu0
  %v1385 = vadd.f32 %v72, %v1384
  %v1386 = vpop.f32.mrb[0].mxu0
  %v1387 = vpop.f32.mrb[0].mxu0
  %v1388 = vpop.f32.mrb[0].mxu0
  %1389 = vdwg.mxu0
  %1390 = vmatprep.subr.bf16.mxu0 %v919
  %1391 = vmatpush1.bf16.msra.mxu0 %v918
  %1392 = vmatprep.subr.bf16.mxu0 %v921
  %1393 = vmatpush1.bf16.msra.mxu0 %v920
  %1394 = vmatprep.subr.bf16.mxu0 0
  %1395 = vmatpush1.bf16.msra.mxu0 0
  %1396 = vmatprep.subr.bf16.mxu0 0
  %1397 = vmatpush1.bf16.msra.mxu0 0
  %1398 = vmatprep.subr.bf16.mxu0 0
  %1399 = vmatpush1.bf16.msra.mxu0 0
  %1400 = vmatprep.subr.bf16.mxu0 0
  %1401 = vmatpush1.bf16.msra.mxu0 0
  %1402 = vmatprep.subr.bf16.mxu0 0
  %1403 = vmatpush1.bf16.msra.mxu0 0
  %1404 = vmatprep.subr.bf16.mxu0 0
  %1405 = vmatpush1.bf16.msra.mxu0 0
  %1406 = vmatprep.subr.bf16.mxu0 0
  %1407 = vmatpush1.bf16.msra.mxu0 0
  %1408 = vmatprep.subr.bf16.mxu0 0
  %1409 = vmatpush1.bf16.msra.mxu0 0
  %1410 = vmatprep.subr.bf16.mxu0 0
  %1411 = vmatpush1.bf16.msra.mxu0 0
  %1412 = vmatprep.subr.bf16.mxu0 0
  %1413 = vmatpush1.bf16.msra.mxu0 0
  %1414 = vmatprep.subr.bf16.mxu0 0
  %1415 = vmatpush1.bf16.msra.mxu0 0
  %1416 = vmatprep.subr.bf16.mxu0 0
  %1417 = vmatpush1.bf16.msra.mxu0 0
  %1418 = vmatprep.subr.bf16.mxu0 0
  %1419 = vmatpush1.bf16.msra.mxu0 0
  %1420 = vmatprep.subr.bf16.mxu0 0
  %1421 = vmatpush1.bf16.msra.mxu0 0
  %1422 = vmatprep.mubr.bf16.mxu0 0
  %1423 = vmatmul.mubr.bf16.gmra.mrb[0].mxu0 %v1348
  %v1424 = vpop.f32.mrb[0].mxu0
  %v1425 = vadd.f32 0.0, %v1424
  %v1426 = vpop.f32.mrb[0].mxu0
  %v1427 = vadd.f32 0.0, %v1426
  %v1428 = vpop.f32.mrb[0].mxu0
  %v1429 = vpop.f32.mrb[0].mxu0
  %1430 = vdwg.mxu0
  %v1431 = vadd.f32 %v1425, %v65
  %v1432 = vadd.f32 %v1427, %v58
  %v1433 = vadd.f32 %v1431, %v1432
  %v1434 = vxor.u32 %v1433, 2147483648
  %v1435 = vmul.f32 %v1434, 1.442695
  %v1436 = vpow.pop %v1435
  %v1437 = vadd.f32 %v1436, 1.0
  %v1438 = vrcp.pop %v1437
  %v1439 = vmul.f32 1.0, %v1438
  %1441 = vrot.lane.b32.xlu0 %v1432, 64
  %v1442 = vpop.permute.xlu0 %1441
  %v1444 = vmul.f32 %v1439, %v1442
  %1446 = vrot.lane.b32.xlu0 %v1444, 64
  %v1447 = vpop.permute.xlu0 %1446
  %v1449 = vadd.f32 %v1431, %v1447
  %v1450 = vtanh.pop %v1449
  %v1451 = vsub.f32 1.0, %v1439
  %1453 = vrot.lane.b32.xlu0 %v1450, 96
  %v1454 = vpop.permute.xlu0 %1453
  %v1456 = vmul.f32 %v1451, %v1454
  %v1457 = vmul.f32 %v1439, %v1342
  %v1458 = vadd.f32 %v1456, %v1457
  %v1459 = vpack.c.bf16 %v1458, %v1458
  %1461 = vrot.lane.b32.xlu0 %v1459, 96
  %v1462 = vpop.permute.xlu0 %1461
  %v1464 = vsel %vm266, %v1462, 0
  %1466 = vmatprep.subr.bf16.mxu0 0
  %1467 = vmatpush1.bf16.msra.mxu0 %v859
  %1468 = vmatprep.subr.bf16.mxu0 0
  %1469 = vmatpush1.bf16.msra.mxu0 %v860
  %1470 = vmatprep.subr.bf16.mxu0 0
  %1471 = vmatpush1.bf16.msra.mxu0 0
  %1472 = vmatprep.subr.bf16.mxu0 0
  %1473 = vmatpush1.bf16.msra.mxu0 0
  %1474 = vmatprep.subr.bf16.mxu0 0
  %1475 = vmatpush1.bf16.msra.mxu0 0
  %1476 = vmatprep.subr.bf16.mxu0 0
  %1477 = vmatpush1.bf16.msra.mxu0 0
  %1478 = vmatprep.subr.bf16.mxu0 0
  %1479 = vmatpush1.bf16.msra.mxu0 0
  %1480 = vmatprep.subr.bf16.mxu0 0
  %1481 = vmatpush1.bf16.msra.mxu0 0
  %1482 = vmatprep.subr.bf16.mxu0 0
  %1483 = vmatpush1.bf16.msra.mxu0 0
  %1484 = vmatprep.subr.bf16.mxu0 0
  %1485 = vmatpush1.bf16.msra.mxu0 0
  %1486 = vmatprep.subr.bf16.mxu0 0
  %1487 = vmatpush1.bf16.msra.mxu0 0
  %1488 = vmatprep.subr.bf16.mxu0 0
  %1489 = vmatpush1.bf16.msra.mxu0 0
  %1490 = vmatprep.subr.bf16.mxu0 0
  %1491 = vmatpush1.bf16.msra.mxu0 0
  %1492 = vmatprep.subr.bf16.mxu0 0
  %1493 = vmatpush1.bf16.msra.mxu0 0
  %1494 = vmatprep.subr.bf16.mxu0 0
  %1495 = vmatpush1.bf16.msra.mxu0 0
  %1496 = vmatprep.subr.bf16.mxu0 0
  %1497 = vmatpush1.bf16.msra.mxu0 0
  %1498 = vmatprep.mubr.bf16.mxu0 0
  %1499 = vmatmul.mubr.bf16.gmra.mrb[0].mxu0 %v1464
  %v1500 = vpop.f32.mrb[0].mxu0
  %v1501 = vadd.f32 %v72, %v1500
  %v1502 = vpop.f32.mrb[0].mxu0
  %v1503 = vpop.f32.mrb[0].mxu0
  %v1504 = vpop.f32.mrb[0].mxu0
  %1505 = vdwg.mxu0
  %1506 = vmatprep.subr.bf16.mxu0 %v919
  %1507 = vmatpush1.bf16.msra.mxu0 %v918
  %1508 = vmatprep.subr.bf16.mxu0 %v921
  %1509 = vmatpush1.bf16.msra.mxu0 %v920
  %1510 = vmatprep.subr.bf16.mxu0 0
  %1511 = vmatpush1.bf16.msra.mxu0 0
  %1512 = vmatprep.subr.bf16.mxu0 0
  %1513 = vmatpush1.bf16.msra.mxu0 0
  %1514 = vmatprep.subr.bf16.mxu0 0
  %1515 = vmatpush1.bf16.msra.mxu0 0
  %1516 = vmatprep.subr.bf16.mxu0 0
  %1517 = vmatpush1.bf16.msra.mxu0 0
  %1518 = vmatprep.subr.bf16.mxu0 0
  %1519 = vmatpush1.bf16.msra.mxu0 0
  %1520 = vmatprep.subr.bf16.mxu0 0
  %1521 = vmatpush1.bf16.msra.mxu0 0
  %1522 = vmatprep.subr.bf16.mxu0 0
  %1523 = vmatpush1.bf16.msra.mxu0 0
  %1524 = vmatprep.subr.bf16.mxu0 0
  %1525 = vmatpush1.bf16.msra.mxu0 0
  %1526 = vmatprep.subr.bf16.mxu0 0
  %1527 = vmatpush1.bf16.msra.mxu0 0
  %1528 = vmatprep.subr.bf16.mxu0 0
  %1529 = vmatpush1.bf16.msra.mxu0 0
  %1530 = vmatprep.subr.bf16.mxu0 0
  %1531 = vmatpush1.bf16.msra.mxu0 0
  %1532 = vmatprep.subr.bf16.mxu0 0
  %1533 = vmatpush1.bf16.msra.mxu0 0
  %1534 = vmatprep.subr.bf16.mxu0 0
  %1535 = vmatpush1.bf16.msra.mxu0 0
  %1536 = vmatprep.subr.bf16.mxu0 0
  %1537 = vmatpush1.bf16.msra.mxu0 0
  %1538 = vmatprep.mubr.bf16.mxu0 0
  %1539 = vmatmul.mubr.bf16.gmra.mrb[0].mxu0 %v1464
  %v1540 = vpop.f32.mrb[0].mxu0
  %v1541 = vadd.f32 0.0, %v1540
  %v1542 = vpop.f32.mrb[0].mxu0
  %v1543 = vadd.f32 0.0, %v1542
  %v1544 = vpop.f32.mrb[0].mxu0
  %v1545 = vpop.f32.mrb[0].mxu0
  %1546 = vdwg.mxu0
  %v1547 = vadd.f32 %v1541, %v65
  %v1548 = vadd.f32 %v1543, %v58
  %v1549 = vadd.f32 %v1547, %v1548
  %v1550 = vxor.u32 %v1549, 2147483648
  %v1551 = vmul.f32 %v1550, 1.442695
  %v1552 = vpow.pop %v1551
  %v1553 = vadd.f32 %v1552, 1.0
  %v1554 = vrcp.pop %v1553
  %v1555 = vmul.f32 1.0, %v1554
  %1557 = vrot.lane.b32.xlu0 %v1548, 64
  %v1558 = vpop.permute.xlu0 %1557
  %v1560 = vmul.f32 %v1555, %v1558
  %1562 = vrot.lane.b32.xlu0 %v1560, 64
  %v1563 = vpop.permute.xlu0 %1562
  %v1565 = vadd.f32 %v1547, %v1563
  %v1566 = vtanh.pop %v1565
  %v1567 = vsub.f32 1.0, %v1555
  %1569 = vrot.lane.b32.xlu0 %v1566, 96
  %v1570 = vpop.permute.xlu0 %1569
  %v1572 = vmul.f32 %v1567, %v1570
  %v1573 = vmul.f32 %v1555, %v1458
  %v1574 = vadd.f32 %v1572, %v1573
  %v1575 = vpack.c.bf16 %v1574, %v1574
  %1577 = vrot.lane.b32.xlu0 %v1575, 96
  %v1578 = vpop.permute.xlu0 %1577
  %v1580 = vsel %vm266, %v1578, 0
  %1582 = vmatprep.subr.bf16.mxu0 0
  %1583 = vmatpush1.bf16.msra.mxu0 %v859
  %1584 = vmatprep.subr.bf16.mxu0 0
  %1585 = vmatpush1.bf16.msra.mxu0 %v860
  %1586 = vmatprep.subr.bf16.mxu0 0
  %1587 = vmatpush1.bf16.msra.mxu0 0
  %1588 = vmatprep.subr.bf16.mxu0 0
  %1589 = vmatpush1.bf16.msra.mxu0 0
  %1590 = vmatprep.subr.bf16.mxu0 0
  %1591 = vmatpush1.bf16.msra.mxu0 0
  %1592 = vmatprep.subr.bf16.mxu0 0
  %1593 = vmatpush1.bf16.msra.mxu0 0
  %1594 = vmatprep.subr.bf16.mxu0 0
  %1595 = vmatpush1.bf16.msra.mxu0 0
  %1596 = vmatprep.subr.bf16.mxu0 0
  %1597 = vmatpush1.bf16.msra.mxu0 0
  %1598 = vmatprep.subr.bf16.mxu0 0
  %1599 = vmatpush1.bf16.msra.mxu0 0
  %1600 = vmatprep.subr.bf16.mxu0 0
  %1601 = vmatpush1.bf16.msra.mxu0 0
  %1602 = vmatprep.subr.bf16.mxu0 0
  %1603 = vmatpush1.bf16.msra.mxu0 0
  %1604 = vmatprep.subr.bf16.mxu0 0
  %1605 = vmatpush1.bf16.msra.mxu0 0
  %1606 = vmatprep.subr.bf16.mxu0 0
  %1607 = vmatpush1.bf16.msra.mxu0 0
  %1608 = vmatprep.subr.bf16.mxu0 0
  %1609 = vmatpush1.bf16.msra.mxu0 0
  %1610 = vmatprep.subr.bf16.mxu0 0
  %1611 = vmatpush1.bf16.msra.mxu0 0
  %1612 = vmatprep.subr.bf16.mxu0 0
  %1613 = vmatpush1.bf16.msra.mxu0 0
  %1614 = vmatprep.mubr.bf16.mxu0 0
  %1615 = vmatmul.mubr.bf16.gmra.mrb[0].mxu0 %v1580
  %v1616 = vpop.f32.mrb[0].mxu0
  %v1617 = vadd.f32 %v72, %v1616
  %v1618 = vpop.f32.mrb[0].mxu0
  %v1619 = vpop.f32.mrb[0].mxu0
  %v1620 = vpop.f32.mrb[0].mxu0
  %1621 = vdwg.mxu0
  %1622 = vmatprep.subr.bf16.mxu0 %v919
  %1623 = vmatpush1.bf16.msra.mxu0 %v918
  %1624 = vmatprep.subr.bf16.mxu0 %v921
  %1625 = vmatpush1.bf16.msra.mxu0 %v920
  %1626 = vmatprep.subr.bf16.mxu0 0
  %1627 = vmatpush1.bf16.msra.mxu0 0
  %1628 = vmatprep.subr.bf16.mxu0 0
  %1629 = vmatpush1.bf16.msra.mxu0 0
  %1630 = vmatprep.subr.bf16.mxu0 0
  %1631 = vmatpush1.bf16.msra.mxu0 0
  %1632 = vmatprep.subr.bf16.mxu0 0
  %1633 = vmatpush1.bf16.msra.mxu0 0
  %1634 = vmatprep.subr.bf16.mxu0 0
  %1635 = vmatpush1.bf16.msra.mxu0 0
  %1636 = vmatprep.subr.bf16.mxu0 0
  %1637 = vmatpush1.bf16.msra.mxu0 0
  %1638 = vmatprep.subr.bf16.mxu0 0
  %1639 = vmatpush1.bf16.msra.mxu0 0
  %1640 = vmatprep.subr.bf16.mxu0 0
  %1641 = vmatpush1.bf16.msra.mxu0 0
  %1642 = vmatprep.subr.bf16.mxu0 0
  %1643 = vmatpush1.bf16.msra.mxu0 0
  %1644 = vmatprep.subr.bf16.mxu0 0
  %1645 = vmatpush1.bf16.msra.mxu0 0
  %1646 = vmatprep.subr.bf16.mxu0 0
  %1647 = vmatpush1.bf16.msra.mxu0 0
  %1648 = vmatprep.subr.bf16.mxu0 0
  %1649 = vmatpush1.bf16.msra.mxu0 0
  %1650 = vmatprep.subr.bf16.mxu0 0
  %1651 = vmatpush1.bf16.msra.mxu0 0
  %1652 = vmatprep.subr.bf16.mxu0 0
  %1653 = vmatpush1.bf16.msra.mxu0 0
  %1654 = vmatprep.mubr.bf16.mxu0 0
  %1655 = vmatmul.mubr.bf16.gmra.mrb[0].mxu0 %v1580
  %v1656 = vpop.f32.mrb[0].mxu0
  %v1657 = vadd.f32 0.0, %v1656
  %v1658 = vpop.f32.mrb[0].mxu0
  %v1659 = vadd.f32 0.0, %v1658
  %v1660 = vpop.f32.mrb[0].mxu0
  %v1661 = vpop.f32.mrb[0].mxu0
  %1662 = vdwg.mxu0
  %v1663 = vadd.f32 %v1657, %v65
  %v1664 = vadd.f32 %v1659, %v58
  %v1665 = vadd.f32 %v1663, %v1664
  %v1666 = vxor.u32 %v1665, 2147483648
  %v1667 = vmul.f32 %v1666, 1.442695
  %v1668 = vpow.pop %v1667
  %v1669 = vadd.f32 %v1668, 1.0
  %v1670 = vrcp.pop %v1669
  %v1671 = vmul.f32 1.0, %v1670
  %1673 = vrot.lane.b32.xlu0 %v1664, 64
  %v1674 = vpop.permute.xlu0 %1673
  %v1676 = vmul.f32 %v1671, %v1674
  %1678 = vrot.lane.b32.xlu0 %v1676, 64
  %v1679 = vpop.permute.xlu0 %1678
  %v1681 = vadd.f32 %v1663, %v1679
  %v1682 = vtanh.pop %v1681
  %v1683 = vsub.f32 1.0, %v1671
  %1685 = vrot.lane.b32.xlu0 %v1682, 96
  %v1686 = vpop.permute.xlu0 %1685
  %v1688 = vmul.f32 %v1683, %v1686
  %v1689 = vmul.f32 %v1671, %v1574
  %v1690 = vadd.f32 %v1688, %v1689
  %v1691 = vpack.c.bf16 %v1690, %v1690
  %1693 = vrot.lane.b32.xlu0 %v1691, 96
  %v1694 = vpop.permute.xlu0 %1693
  %v1696 = vsel %vm266, %v1694, 0
  %1698 = vmatprep.subr.bf16.mxu0 0
  %1699 = vmatpush1.bf16.msra.mxu0 %v859
  %1700 = vmatprep.subr.bf16.mxu0 0
  %1701 = vmatpush1.bf16.msra.mxu0 %v860
  %1702 = vmatprep.subr.bf16.mxu0 0
  %1703 = vmatpush1.bf16.msra.mxu0 0
  %1704 = vmatprep.subr.bf16.mxu0 0
  %1705 = vmatpush1.bf16.msra.mxu0 0
  %1706 = vmatprep.subr.bf16.mxu0 0
  %1707 = vmatpush1.bf16.msra.mxu0 0
  %1708 = vmatprep.subr.bf16.mxu0 0
  %1709 = vmatpush1.bf16.msra.mxu0 0
  %1710 = vmatprep.subr.bf16.mxu0 0
  %1711 = vmatpush1.bf16.msra.mxu0 0
  %1712 = vmatprep.subr.bf16.mxu0 0
  %1713 = vmatpush1.bf16.msra.mxu0 0
  %1714 = vmatprep.subr.bf16.mxu0 0
  %1715 = vmatpush1.bf16.msra.mxu0 0
  %1716 = vmatprep.subr.bf16.mxu0 0
  %1717 = vmatpush1.bf16.msra.mxu0 0
  %1718 = vmatprep.subr.bf16.mxu0 0
  %1719 = vmatpush1.bf16.msra.mxu0 0
  %1720 = vmatprep.subr.bf16.mxu0 0
  %1721 = vmatpush1.bf16.msra.mxu0 0
  %1722 = vmatprep.subr.bf16.mxu0 0
  %1723 = vmatpush1.bf16.msra.mxu0 0
  %1724 = vmatprep.subr.bf16.mxu0 0
  %1725 = vmatpush1.bf16.msra.mxu0 0
  %1726 = vmatprep.subr.bf16.mxu0 0
  %1727 = vmatpush1.bf16.msra.mxu0 0
  %1728 = vmatprep.subr.bf16.mxu0 0
  %1729 = vmatpush1.bf16.msra.mxu0 0
  %1730 = vmatprep.mubr.bf16.mxu0 0
  %1731 = vmatmul.mubr.bf16.gmra.mrb[0].mxu0 %v1696
  %v1732 = vpop.f32.mrb[0].mxu0
  %v1733 = vadd.f32 %v72, %v1732
  %v1734 = vpop.f32.mrb[0].mxu0
  %v1735 = vpop.f32.mrb[0].mxu0
  %v1736 = vpop.f32.mrb[0].mxu0
  %1737 = vdwg.mxu0
  %1739 = vrot.lane.b32.xlu0 %v1037, 64
  %v1740 = vpop.permute.xlu0 %1739
  %1743 = vrot.lane.b32.xlu0 %v1269, 64
  %v1744 = vpop.permute.xlu0 %1743
  %1747 = vrot.lane.b32.xlu0 %v1501, 64
  %v1748 = vpop.permute.xlu0 %1747
  %1751 = vrot.lane.b32.xlu0 %v1733, 64
  %v1752 = vpop.permute.xlu0 %1751
  %v1754 = vsel %vm137, %v901, %v1740
  %v1755 = vsel %vm137, %v1153, %v1744
  %v1756 = vsel %vm137, %v1385, %v1748
  %v1757 = vsel %vm137, %v1617, %v1752
  %1758 = vst [vmem:[%s9] sm:$0xff] %v1754
  %1759 = vst [vmem:[%s9 + $0x8] sm:$0xff] %v1755
  %1760 = vst [vmem:[%s9 + $0x10] sm:$0xff] %v1756
  %1761 = vst [vmem:[%s9 + $0x18] sm:$0xff] %v1757
  // Predicated region
  $region38: #{seq2seq_forward.1} parent=0 // pred_check
    _
  $region39: #{seq2seq_forward.1} parent=0 // pred_check_branch
    %1763 = sbr.rel (0) target = $region41
  $region40: #{seq2seq_forward.1} parent=0 // pred_region
    _
  $region41: #{seq2seq_forward.1} parent=0 // pred_fallthru
    _
  // Predicated region
  $region42: #{seq2seq_forward.1} parent=0 // pred_check
    _
  $region43: #{seq2seq_forward.1} parent=0 // pred_check_branch
    %1765 = sbr.rel (0) target = $region45
  $region44: #{seq2seq_forward.1} parent=0 // pred_region
    _
  $region45: #{seq2seq_forward.1} parent=0 // pred_fallthru
    _

</llo_original>
